<compile_context>
chip_gen: v5e
topology: v5e:2x2
jax: 0.10.0
libtpu: 0.0.40
codegen_flags: <defaults>
</compile_context>

<pallas_src>
import math
from functools import partial

import jax
import jax.numpy as jnp
from jax.experimental import pallas as pl
from jax.experimental.pallas import tpu as pltpu

_LANE = 128
_SUBLANE = 8


# ----------------------------------------------------------------------------
# Config helpers mirroring MLP.__init__ / MLP._calculate_skip_points exactly.
# ----------------------------------------------------------------------------
def _calculate_skip_points(num_layers, use_skip):
    skip_points = []
    total_segments = use_skip + 1
    layers_per_segment = num_layers // total_segments
    remainder = num_layers % total_segments
    current = 0
    for i in range(use_skip):
        increment = layers_per_segment + (1 if i < remainder else 0)
        current += increment
        skip_points.append(current * 2 - 1)
    return skip_points


def _build_layer_ops(num_layers, activation_last_layer):
    """Mirror the nn.ModuleList ordering built in MLP.__init__."""
    ops = [("linear", 0), ("relu",)]
    for li in range(1, num_layers - 1):
        ops.append(("linear", li))
        ops.append(("relu",))
    ops.append(("linear", num_layers - 1))
    act = (activation_last_layer or "").lower()
    if act and act not in ("none", "identity"):
        ops.append((act,))
    return ops


def _apply_act(name, x):
    if name == "relu":
        return jnp.maximum(x, 0.0)
    if name == "gelu":
        return jax.nn.gelu(x, approximate=False)  # torch.nn.GELU default = exact
    if name == "sigmoid":
        return jax.nn.sigmoid(x)
    if name == "tanh":
        return jnp.tanh(x) + 1.0  # nn.Tanh() followed by AddOne()
    raise ValueError(f"Unknown activation: {name}")


# ----------------------------------------------------------------------------
# Sizing helpers.
# ----------------------------------------------------------------------------
def _round_up(v, m):
    return ((v + m - 1) // m) * m


def _cdiv(a, b):
    return -(-a // b)


def _vmem_capacity_bytes():
    try:
        return int(pltpu.get_tpu_info().vmem_capacity_bytes)
    except Exception:
        return 64 * 1024 * 1024  # conservative fallback (v7x per-TensorCore VMEM)


def _choose_tiles(batch, x_w, out_w, max_w, weight_bytes, x_item, out_item, vmem_cap):
    """Pick (batch_tile, grid_steps, padded_batch) from the VMEM budget."""
    budget = int(vmem_cap * 0.60)  # headroom for Mosaic internal scratch / spills
    # Larger tile ceiling on 128 MiB parts (v5e/v6e); tighter ceiling on 64 MiB (v7x).
    tb = 2048 if vmem_cap >= (96 << 20) else 512
    # Per-row working set: double-buffered x/out tiles + ~6 live f32 intermediates
    # (h, saved scratch, post-dot value, cast copies) of the widest layer.
    per_row = 2 * x_w * x_item + 2 * out_w * out_item + 6 * max_w * 4
    while tb > _SUBLANE and weight_bytes + tb * per_row > budget:
        tb //= 2
    if weight_bytes + _SUBLANE * per_row > budget:
        # TODO(synk): weight-streaming fallback (layer/K grid axis) not implemented.
        raise NotImplementedError(
            "Resident MLP weights exceed the VMEM budget; weight streaming is "
            "not implemented for this kernel.")

    b8 = _round_up(batch, _SUBLANE)
    tb = min(tb, b8)
    if batch >= 2 * _SUBLANE:
        # Guarantee >= 2 grid steps so the 'parallel' batch axis can shard
        # across both TensorCores on v7x-class chips.
        tb = min(tb, _round_up(_cdiv(batch, 2), _SUBLANE))
    tb = max(tb, _SUBLANE)
    steps = _cdiv(b8, tb)
    if vmem_cap < (96 << 20) and steps > 1 and steps % 2 == 1:
        steps += 1  # even step count keeps both v7x TensorCores busy
    # Rebalance the tile so batch padding stays minimal for this step count.
    tb = _round_up(_cdiv(b8, steps), _SUBLANE)
    b_pad = steps * tb
    return tb, steps, b_pad


# ----------------------------------------------------------------------------
# One-time parameter preparation (model-load time, NOT per forward call).
# ----------------------------------------------------------------------------
def prepare_mlp_params(params, *, num_layers, use_skip, compute_dtype=jnp.bfloat16):
    """params: list of (W[in,out], b[out]) per Linear (W already = W_torch.T).

    Returns (weights, biases, meta) with weights zero-padded / cast to bf16 and
    biases zero-padded in f32, laid out so the forward kernel needs no per-call
    padding ops.
    """
    assert len(params) == num_layers
    in_dims = [w.shape[0] for w, _ in params]
    out_dims = [w.shape[1] for w, _ in params]

    # Output (N) width per layer: hidden layers padded to 128 lanes; the FINAL
    # layer is kept at true width (true-width output block -> no output
    # padding, no post-kernel lane slice, far fewer HBM bytes when out_dim<<128).
    n_w = [_round_up(d, _LANE) for d in out_dims[:-1]] + [out_dims[-1]]

    # Input (K) width of layer 0 follows the x layout; layer i>0 follows the
    # previous layer's padded output width.
    if use_skip > 0:
        x_width = _round_up(in_dims[0], _LANE)
        # nn.Identity residual transforms require input_dim == hidden_dim, so
        # the padded x width must equal the padded hidden width.
        assert x_width == n_w[0], (
            "use_skip > 0 requires input_dim == hidden_dim (nn.Identity residuals)")
    else:
        x_width = in_dims[0]  # true width; full-extent last-dim block is legal
    k_w = [x_width] + n_w[:-1]

    ws, bs = [], []
    for li, (w, b) in enumerate(params):
        wp = jnp.zeros((k_w[li], n_w[li]), compute_dtype)
        wp = wp.at[: w.shape[0], : w.shape[1]].set(w.astype(compute_dtype))
        bp = jnp.zeros((1, n_w[li]), jnp.float32)
        bp = bp.at[0, : b.shape[0]].set(b.astype(jnp.float32))
        ws.append(wp)
        bs.append(bp)

    meta = dict(x_width=x_width, out_width=n_w[-1], skip_width=n_w[0],
                n_w=tuple(n_w), k_w=tuple(k_w))
    return tuple(ws), tuple(bs), meta


# ----------------------------------------------------------------------------
# Pallas kernel: full MLP forward on one (TB, *) batch tile.
# ----------------------------------------------------------------------------
def _mlp_kernel(*refs, num_linear, ops, skip_points, use_skip, scaler):
    # refs = (x_ref, w0..w_{L-1}, b0..b_{L-1}, out_ref[, saved_scratch])
    x_ref = refs[0]
    w_refs = refs[1:1 + num_linear]
    b_refs = refs[1 + num_linear:1 + 2 * num_linear]
    out_ref = refs[1 + 2 * num_linear]
    saved_ref = refs[2 + 2 * num_linear] if use_skip > 0 else None

    last_skip = max(skip_points) if skip_points else -1

    # x feeds the first matmul at its own dtype (no f32 round-trip); matmul
    # operands are cast to the weight dtype (bf16) -> MXU-native rate with
    # f32 accumulation. Biases / activations / residuals run in f32.
    h = x_ref[...]
    if use_skip > 0:
        # Residual anchor lives in f32 VMEM scratch (width == padded hidden
        # width == padded x width, guaranteed by prepare_mlp_params).
        saved_ref[...] = h.astype(jnp.float32)

    for i, op in enumerate(ops):
        if op[0] == "linear":
            li = op[1]
            w = w_refs[li][...]                              # bf16 (K_i, N_i)
            b = b_refs[li][...]                              # f32  (1, N_i)
            h = jnp.dot(h.astype(w.dtype), w,
                        preferred_element_type=jnp.float32) + b
        else:
            h = _apply_act(op[0], h)
        if use_skip > 0 and i in skip_points:
            # residual_transforms are nn.Identity(); shapes already match.
            h = h + saved_ref[...]
            if i != last_skip:               # skip the dead final store
                saved_ref[...] = h

    out_ref[...] = (h * scaler).astype(out_ref.dtype)


# ----------------------------------------------------------------------------
# Forward wrapper (per-call path: no weight padding, minimal activation copies).
# ----------------------------------------------------------------------------
def mlp_forward(x, prepared, *, num_layers, use_skip, activation_last_layer, scaler):
    ws, bs, meta = prepared
    B, in_dim = x.shape
    x_width, out_width = meta["x_width"], meta["out_width"]

    x_item = jnp.dtype(x.dtype).itemsize
    weight_bytes = sum(int(w.size) * w.dtype.itemsize for w in ws)
    weight_bytes += sum(int(b.size) * 4 for b in bs)
    vmem_cap = _vmem_capacity_bytes()
    max_w = max(meta["n_w"] + (x_width,))
    tb, steps, b_pad = _choose_tiles(B, x_width, out_width, max_w,
                                     weight_bytes, x_item, x_item, vmem_cap)

    # Only materialize a padded copy of x when strictly necessary (misaligned
    # input lanes with skips, or batch not divisible by the tile).
    if (b_pad, x_width) != x.shape:
        xp = jnp.zeros((b_pad, x_width), x.dtype).at[:B, :in_dim].set(x)
    else:
        xp = x

    skip_points = tuple(_calculate_skip_points(num_layers, use_skip)) if use_skip > 0 else ()
    ops = tuple(_build_layer_ops(num_layers, activation_last_layer))

    kernel = partial(_mlp_kernel, num_linear=num_layers, ops=ops,
                     skip_points=skip_points, use_skip=use_skip,
                     scaler=float(scaler))

    # Advisory cost estimate for XLA scheduling.
    flops = 2 * b_pad * sum(k * n for k, n in zip(meta["k_w"], meta["n_w"]))
    act_l = (activation_last_layer or "").lower()
    transcend = b_pad * out_width if act_l in ("gelu", "sigmoid", "tanh") else 0
    bytes_accessed = int(xp.size) * x_item + weight_bytes + b_pad * out_width * x_item
    cost = pl.CostEstimate(flops=int(flops), transcendentals=int(transcend),
                           bytes_accessed=int(bytes_accessed))

    def run(single_buffer_weights):
        # Resident (constant index_map) weights/biases: single-buffered so they
        # don't cost 2x VMEM; x/out blocks keep default double-buffering.
        resident = {"pipeline_mode": pl.Buffered(1)} if single_buffer_weights else {}
        in_specs = [pl.BlockSpec((tb, x_width), lambda i: (i, 0))]
        for w in ws:
            in_specs.append(pl.BlockSpec(w.shape, lambda i: (0, 0), **resident))
        for b in bs:
            in_specs.append(pl.BlockSpec(b.shape, lambda i: (0, 0), **resident))
        out_specs = pl.BlockSpec((tb, out_width), lambda i: (i, 0))
        scratch = [pltpu.VMEM((tb, meta["skip_width"]), jnp.float32)] if use_skip > 0 else []
        return pl.pallas_call(
            kernel,
            out_shape=jax.ShapeDtypeStruct((b_pad, out_width), x.dtype),
            grid_spec=pltpu.PrefetchScalarGridSpec(
                num_scalar_prefetch=0,
                grid=(steps,),
                in_specs=in_specs,
                out_specs=out_specs,
                scratch_shapes=scratch,
            ),
            compiler_params=pltpu.CompilerParams(
                dimension_semantics=("parallel",),        # shard batch across TCs (v7x)
                vmem_limit_bytes=int(vmem_cap * 0.80),    # above 16/32 MiB scoped defaults
            ),
            cost_estimate=cost,
        )(xp, *ws, *bs)

    try:
        out = jax.block_until_ready(run(True))
    except Exception:
        # Fallback if single-buffered resident blocks are rejected by this
        # jax/Mosaic version; budget headroom (0.60 factor) covers 2x weights.
        out = run(False)

    return out if b_pad == B else out[:B]


# ----------------------------------------------------------------------------
# Pure-JAX reference (mirrors kernel numerics: bf16 matmul operands, f32 acc).
# ----------------------------------------------------------------------------
def mlp_reference(x, params, *, num_layers, use_skip, activation_last_layer, scaler,
                  compute_dtype=jnp.bfloat16):
    skip_points = _calculate_skip_points(num_layers, use_skip) if use_skip > 0 else []
    ops = _build_layer_ops(num_layers, activation_last_layer)
    h = x.astype(jnp.float32)
    h_saved = h
    for i, op in enumerate(ops):
        if op[0] == "linear":
            w, b = params[op[1]]
            h = jnp.dot(h.astype(compute_dtype), w.astype(compute_dtype),
                        preferred_element_type=jnp.float32) + b.astype(jnp.float32)
        else:
            h = _apply_act(op[0], h)
        if use_skip > 0 and i in skip_points:
            h = h + h_saved
            h_saved = h
    return (h * scaler).astype(x.dtype)


# ----------------------------------------------------------------------------
# Demo / self-test.
# ----------------------------------------------------------------------------
if __name__ == "__main__":
    def make_params(layer_dims, key):
        # Deterministic init mimicking nn.Linear defaults: U(-k, k), k=1/sqrt(fan_in)
        params = []
        keys = jax.random.split(key, 2 * len(layer_dims))
        for li, (fin, fout) in enumerate(layer_dims):
            bound = 1.0 / math.sqrt(fin)
            w = jax.random.uniform(keys[2 * li], (fin, fout), jnp.float32, -bound, bound)
            b = jax.random.uniform(keys[2 * li + 1], (fout,), jnp.float32, -bound, bound)
            params.append((w, b))
        return params

    key = jax.random.PRNGKey(0)
    k1, k2, k3, k4 = jax.random.split(key, 4)

    # bf16-operand / f32-accumulate matmul policy tolerance (documented choice).
    TOL = 3e-3

    # --- Config A: MLP(128, 128, 16, num_layers=4, 'relu', scaler=0.5, use_skip=2)
    # Lane-aligned dims: exercises skips, 2-step parallel grid, copy-free I/O,
    # true-width (16) output block.
    cfgA = dict(num_layers=4, use_skip=2, activation_last_layer="relu", scaler=0.5)
    dimsA = [(128, 128), (128, 128), (128, 128), (128, 16)]
    paramsA = make_params(dimsA, k1)
    xA = jax.random.normal(k2, (16, 128), jnp.float32)
    prepA = prepare_mlp_params(paramsA, num_layers=cfgA["num_layers"],
                               use_skip=cfgA["use_skip"])        # model-load time
    outA = jax.block_until_ready(mlp_forward(xA, prepA, **cfgA))
    refA = mlp_reference(xA, paramsA, **cfgA)
    assert outA.shape == (16, 16)
    assert jnp.allclose(outA, refA, atol=TOL, rtol=TOL), (
        f"config A max abs err {float(jnp.max(jnp.abs(outA - refA)))}")

    # --- Config B: MLP(24, 40, 20, num_layers=3, 'sigmoid', scaler=1.0, use_skip=0)
    # Unaligned dims + odd batch: exercises true-width x input, batch padding
    # path, transcendental last activation.
    cfgB = dict(num_layers=3, use_skip=0, activation_last_layer="sigmoid", scaler=1.0)
    dimsB = [(24, 40), (40, 40), (40, 20)]
    paramsB = make_params(dimsB, k3)
    xB = jax.random.normal(k4, (10, 24), jnp.float32)
    prepB = prepare_mlp_params(paramsB, num_layers=cfgB["num_layers"],
                               use_skip=cfgB["use_skip"])
    outB = jax.block_until_ready(mlp_forward(xB, prepB, **cfgB))
    refB = mlp_reference(xB, paramsB, **cfgB)
    assert outB.shape == (10, 20)
    assert jnp.allclose(outB, refB, atol=TOL, rtol=TOL), (
        f"config B max abs err {float(jnp.max(jnp.abs(outB - refB)))}")

    print("KERNEL_OK")
</pallas_src>

<mosaic_0001>
module attributes {stable_mosaic.version = 11 : i64} {
  func.func @_mlp_kernel(%arg0: i32, %arg1: memref<8x128xf32, #tpu.memory_space<vmem>>, %arg2: memref<128x128xbf16, #tpu.memory_space<vmem>>, %arg3: memref<128x128xbf16, #tpu.memory_space<vmem>>, %arg4: memref<128x128xbf16, #tpu.memory_space<vmem>>, %arg5: memref<128x16xbf16, #tpu.memory_space<vmem>>, %arg6: memref<1x128xf32, #tpu.memory_space<vmem>>, %arg7: memref<1x128xf32, #tpu.memory_space<vmem>>, %arg8: memref<1x128xf32, #tpu.memory_space<vmem>>, %arg9: memref<1x16xf32, #tpu.memory_space<vmem>>, %arg10: memref<8x16xf32, #tpu.memory_space<vmem>>, %arg11: memref<8x128xf32, #tpu.memory_space<vmem>>) attributes {dimension_semantics = [#tpu.dimension_semantics<parallel>], iteration_bounds = array<i64: 2>, scalar_prefetch = 0 : i64, scratch_operands = 1 : i64, tpu.core_type = #tpu.core_type<tc>, window_params = [{transform_indices = @transform_0, window_bounds = array<i64: 8, 128>}, {pipeline_mode = #tpu.pipeline_mode<synchronous>, transform_indices = @transform_1, window_bounds = array<i64: 128, 128>}, {pipeline_mode = #tpu.pipeline_mode<synchronous>, transform_indices = @transform_2, window_bounds = array<i64: 128, 128>}, {pipeline_mode = #tpu.pipeline_mode<synchronous>, transform_indices = @transform_3, window_bounds = array<i64: 128, 128>}, {pipeline_mode = #tpu.pipeline_mode<synchronous>, transform_indices = @transform_4, window_bounds = array<i64: 128, 16>}, {pipeline_mode = #tpu.pipeline_mode<synchronous>, transform_indices = @transform_5, window_bounds = array<i64: 1, 128>}, {pipeline_mode = #tpu.pipeline_mode<synchronous>, transform_indices = @transform_6, window_bounds = array<i64: 1, 128>}, {pipeline_mode = #tpu.pipeline_mode<synchronous>, transform_indices = @transform_7, window_bounds = array<i64: 1, 128>}, {pipeline_mode = #tpu.pipeline_mode<synchronous>, transform_indices = @transform_8, window_bounds = array<i64: 1, 16>}, {transform_indices = @transform_9, window_bounds = array<i64: 8, 16>}]} {
    %c0 = arith.constant 0 : index
    %c0_0 = arith.constant 0 : index
    %0 = vector.load %arg1[%c0, %c0_0] : memref<8x128xf32, #tpu.memory_space<vmem>>, vector<8x128xf32>
    %c0_1 = arith.constant 0 : index
    %c0_2 = arith.constant 0 : index
    %1 = vector.load %arg11[%c0_1, %c0_2] : memref<8x128xf32, #tpu.memory_space<vmem>>, vector<8x128xf32>
    tpu.vector_store %arg11[%c0_1, %c0_2], %0 {strides = array<i32>} : memref<8x128xf32, #tpu.memory_space<vmem>>, vector<8x128xf32>,
    %c0_3 = arith.constant 0 : index
    %c0_4 = arith.constant 0 : index
    %2 = vector.load %arg2[%c0_3, %c0_4] : memref<128x128xbf16, #tpu.memory_space<vmem>>, vector<128x128xbf16>
    %c0_5 = arith.constant 0 : index
    %c0_6 = arith.constant 0 : index
    %3 = vector.load %arg6[%c0_5, %c0_6] : memref<1x128xf32, #tpu.memory_space<vmem>>, vector<1x128xf32>
    %4 = arith.truncf %0 : vector<8x128xf32> to vector<8x128xbf16>
    %cst = arith.constant dense<0.000000e+00> : vector<8x128xf32>
    %5 = tpu.matmul %4, %2, %cst {dimension_numbers = #tpu.dot_dimension_numbers<[1], [0], [0], [1], [0, 0, 1, 1], [], []>} : vector<8x128xbf16>, vector<128x128xbf16>, vector<8x128xf32> -> vector<8x128xf32>
    %6 = vector.broadcast %3 : vector<1x128xf32> to vector<8x128xf32>
    %7 = arith.addf %5, %6 : vector<8x128xf32>
    %cst_7 = arith.constant 0.000000e+00 : f32
    %8 = vector.broadcast %cst_7 : f32 to vector<8x128xf32>
    %9 = arith.maximumf %7, %8 : vector<8x128xf32>
    %c0_8 = arith.constant 0 : index
    %c0_9 = arith.constant 0 : index
    %10 = vector.load %arg3[%c0_8, %c0_9] : memref<128x128xbf16, #tpu.memory_space<vmem>>, vector<128x128xbf16>
    %c0_10 = arith.constant 0 : index
    %c0_11 = arith.constant 0 : index
    %11 = vector.load %arg7[%c0_10, %c0_11] : memref<1x128xf32, #tpu.memory_space<vmem>>, vector<1x128xf32>
    %12 = arith.truncf %9 : vector<8x128xf32> to vector<8x128xbf16>
    %cst_12 = arith.constant dense<0.000000e+00> : vector<8x128xf32>
    %13 = tpu.matmul %12, %10, %cst_12 {dimension_numbers = #tpu.dot_dimension_numbers<[1], [0], [0], [1], [0, 0, 1, 1], [], []>} : vector<8x128xbf16>, vector<128x128xbf16>, vector<8x128xf32> -> vector<8x128xf32>
    %14 = vector.broadcast %11 : vector<1x128xf32> to vector<8x128xf32>
    %15 = arith.addf %13, %14 : vector<8x128xf32>
    %cst_13 = arith.constant 0.000000e+00 : f32
    %16 = vector.broadcast %cst_13 : f32 to vector<8x128xf32>
    %17 = arith.maximumf %15, %16 : vector<8x128xf32>
    %c0_14 = arith.constant 0 : index
    %c0_15 = arith.constant 0 : index
    %18 = vector.load %arg11[%c0_14, %c0_15] : memref<8x128xf32, #tpu.memory_space<vmem>>, vector<8x128xf32>
    %19 = arith.addf %17, %18 : vector<8x128xf32>
    %c0_16 = arith.constant 0 : index
    %c0_17 = arith.constant 0 : index
    %20 = vector.load %arg11[%c0_16, %c0_17] : memref<8x128xf32, #tpu.memory_space<vmem>>, vector<8x128xf32>
    tpu.vector_store %arg11[%c0_16, %c0_17], %19 {strides = array<i32>} : memref<8x128xf32, #tpu.memory_space<vmem>>, vector<8x128xf32>,
    %c0_18 = arith.constant 0 : index
    %c0_19 = arith.constant 0 : index
    %21 = vector.load %arg4[%c0_18, %c0_19] : memref<128x128xbf16, #tpu.memory_space<vmem>>, vector<128x128xbf16>
    %c0_20 = arith.constant 0 : index
    %c0_21 = arith.constant 0 : index
    %22 = vector.load %arg8[%c0_20, %c0_21] : memref<1x128xf32, #tpu.memory_space<vmem>>, vector<1x128xf32>
    %23 = arith.truncf %19 : vector<8x128xf32> to vector<8x128xbf16>
    %cst_22 = arith.constant dense<0.000000e+00> : vector<8x128xf32>
    %24 = tpu.matmul %23, %21, %cst_22 {dimension_numbers = #tpu.dot_dimension_numbers<[1], [0], [0], [1], [0, 0, 1, 1], [], []>} : vector<8x128xbf16>, vector<128x128xbf16>, vector<8x128xf32> -> vector<8x128xf32>
    %25 = vector.broadcast %22 : vector<1x128xf32> to vector<8x128xf32>
    %26 = arith.addf %24, %25 : vector<8x128xf32>
    %cst_23 = arith.constant 0.000000e+00 : f32
    %27 = vector.broadcast %cst_23 : f32 to vector<8x128xf32>
    %28 = arith.maximumf %26, %27 : vector<8x128xf32>
    %c0_24 = arith.constant 0 : index
    %c0_25 = arith.constant 0 : index
    %29 = vector.load %arg11[%c0_24, %c0_25] : memref<8x128xf32, #tpu.memory_space<vmem>>, vector<8x128xf32>
    %30 = arith.addf %28, %29 : vector<8x128xf32>
    %c0_26 = arith.constant 0 : index
    %c0_27 = arith.constant 0 : index
    %31 = vector.load %arg5[%c0_26, %c0_27] : memref<128x16xbf16, #tpu.memory_space<vmem>>, vector<128x16xbf16>
    %c0_28 = arith.constant 0 : index
    %c0_29 = arith.constant 0 : index
    %32 = vector.load %arg9[%c0_28, %c0_29] : memref<1x16xf32, #tpu.memory_space<vmem>>, vector<1x16xf32>
    %33 = arith.truncf %30 : vector<8x128xf32> to vector<8x128xbf16>
    %cst_30 = arith.constant dense<0.000000e+00> : vector<8x16xf32>
    %34 = tpu.matmul %33, %31, %cst_30 {dimension_numbers = #tpu.dot_dimension_numbers<[1], [0], [0], [1], [0, 0, 1, 1], [], []>} : vector<8x128xbf16>, vector<128x16xbf16>, vector<8x16xf32> -> vector<8x16xf32>
    %35 = vector.broadcast %32 : vector<1x16xf32> to vector<8x16xf32>
    %36 = arith.addf %34, %35 : vector<8x16xf32>
    %cst_31 = arith.constant 0.000000e+00 : f32
    %37 = vector.broadcast %cst_31 : f32 to vector<8x16xf32>
    %38 = arith.maximumf %36, %37 : vector<8x16xf32>
    %cst_32 = arith.constant 5.000000e-01 : f32
    %39 = vector.broadcast %cst_32 : f32 to vector<8x16xf32>
    %40 = arith.mulf %38, %39 : vector<8x16xf32>
    %c0_33 = arith.constant 0 : index
    %c0_34 = arith.constant 0 : index
    %41 = vector.load %arg10[%c0_33, %c0_34] : memref<8x16xf32, #tpu.memory_space<vmem>>, vector<8x16xf32>
    tpu.vector_store %arg10[%c0_33, %c0_34], %40 {strides = array<i32>} : memref<8x16xf32, #tpu.memory_space<vmem>>, vector<8x16xf32>,
    return
  }
  func.func @transform_0(%arg0: i32) -> (i32, i32) {
    %c0_i32 = arith.constant 0 : i32
    %c0_i32_0 = arith.constant 0 : i32
    return %arg0, %c0_i32 : i32, i32
  }
  func.func @transform_1(%arg0: i32) -> (i32, i32) {
    %c0_i32 = arith.constant 0 : i32
    %c0_i32_0 = arith.constant 0 : i32
    %c0_i32_1 = arith.constant 0 : i32
    return %c0_i32, %c0_i32_0 : i32, i32
  }
  func.func @transform_2(%arg0: i32) -> (i32, i32) {
    %c0_i32 = arith.constant 0 : i32
    %c0_i32_0 = arith.constant 0 : i32
    %c0_i32_1 = arith.constant 0 : i32
    return %c0_i32, %c0_i32_0 : i32, i32
  }
  func.func @transform_3(%arg0: i32) -> (i32, i32) {
    %c0_i32 = arith.constant 0 : i32
    %c0_i32_0 = arith.constant 0 : i32
    %c0_i32_1 = arith.constant 0 : i32
    return %c0_i32, %c0_i32_0 : i32, i32
  }
  func.func @transform_4(%arg0: i32) -> (i32, i32) {
    %c0_i32 = arith.constant 0 : i32
    %c0_i32_0 = arith.constant 0 : i32
    %c0_i32_1 = arith.constant 0 : i32
    return %c0_i32, %c0_i32_0 : i32, i32
  }
  func.func @transform_5(%arg0: i32) -> (i32, i32) {
    %c0_i32 = arith.constant 0 : i32
    %c0_i32_0 = arith.constant 0 : i32
    %c0_i32_1 = arith.constant 0 : i32
    return %c0_i32, %c0_i32_0 : i32, i32
  }
  func.func @transform_6(%arg0: i32) -> (i32, i32) {
    %c0_i32 = arith.constant 0 : i32
    %c0_i32_0 = arith.constant 0 : i32
    %c0_i32_1 = arith.constant 0 : i32
    return %c0_i32, %c0_i32_0 : i32, i32
  }
  func.func @transform_7(%arg0: i32) -> (i32, i32) {
    %c0_i32 = arith.constant 0 : i32
    %c0_i32_0 = arith.constant 0 : i32
    %c0_i32_1 = arith.constant 0 : i32
    return %c0_i32, %c0_i32_0 : i32, i32
  }
  func.func @transform_8(%arg0: i32) -> (i32, i32) {
    %c0_i32 = arith.constant 0 : i32
    %c0_i32_0 = arith.constant 0 : i32
    %c0_i32_1 = arith.constant 0 : i32
    return %c0_i32, %c0_i32_0 : i32, i32
  }
  func.func @transform_9(%arg0: i32) -> (i32, i32) {
    %c0_i32 = arith.constant 0 : i32
    %c0_i32_0 = arith.constant 0 : i32
    return %arg0, %c0_i32 : i32, i32
  }
}

module attributes {stable_mosaic.version = 11 : i64} {
  func.func @_mlp_kernel(%arg0: i32, %arg1: memref<8x128xf32, #tpu.memory_space<vmem>>, %arg2: memref<128x128xbf16, #tpu.memory_space<vmem>>, %arg3: memref<128x128xbf16, #tpu.memory_space<vmem>>, %arg4: memref<128x128xbf16, #tpu.memory_space<vmem>>, %arg5: memref<128x16xbf16, #tpu.memory_space<vmem>>, %arg6: memref<1x128xf32, #tpu.memory_space<vmem>>, %arg7: memref<1x128xf32, #tpu.memory_space<vmem>>, %arg8: memref<1x128xf32, #tpu.memory_space<vmem>>, %arg9: memref<1x16xf32, #tpu.memory_space<vmem>>, %arg10: memref<8x16xf32, #tpu.memory_space<vmem>>, %arg11: memref<8x128xf32, #tpu.memory_space<vmem>>) attributes {dimension_semantics = [#tpu.dimension_semantics<parallel>], iteration_bounds = array<i64: 2>, scalar_prefetch = 0 : i64, scratch_operands = 1 : i64, tpu.core_type = #tpu.core_type<tc>, window_params = [{transform_indices = @transform_0, window_bounds = array<i64: 8, 128>}, {pipeline_mode = #tpu.pipeline_mode<synchronous>, transform_indices = @transform_1, window_bounds = array<i64: 128, 128>}, {pipeline_mode = #tpu.pipeline_mode<synchronous>, transform_indices = @transform_2, window_bounds = array<i64: 128, 128>}, {pipeline_mode = #tpu.pipeline_mode<synchronous>, transform_indices = @transform_3, window_bounds = array<i64: 128, 128>}, {pipeline_mode = #tpu.pipeline_mode<synchronous>, transform_indices = @transform_4, window_bounds = array<i64: 128, 16>}, {pipeline_mode = #tpu.pipeline_mode<synchronous>, transform_indices = @transform_5, window_bounds = array<i64: 1, 128>}, {pipeline_mode = #tpu.pipeline_mode<synchronous>, transform_indices = @transform_6, window_bounds = array<i64: 1, 128>}, {pipeline_mode = #tpu.pipeline_mode<synchronous>, transform_indices = @transform_7, window_bounds = array<i64: 1, 128>}, {pipeline_mode = #tpu.pipeline_mode<synchronous>, transform_indices = @transform_8, window_bounds = array<i64: 1, 16>}, {transform_indices = @transform_9, window_bounds = array<i64: 8, 16>}]} {
    %c0 = arith.constant 0 : index
    %c0_0 = arith.constant 0 : index
    %0 = vector.load %arg1[%c0, %c0_0] : memref<8x128xf32, #tpu.memory_space<vmem>>, vector<8x128xf32>
    %c0_1 = arith.constant 0 : index
    %c0_2 = arith.constant 0 : index
    %1 = vector.load %arg11[%c0_1, %c0_2] : memref<8x128xf32, #tpu.memory_space<vmem>>, vector<8x128xf32>
    tpu.vector_store %arg11[%c0_1, %c0_2], %0 {strides = array<i32>} : memref<8x128xf32, #tpu.memory_space<vmem>>, vector<8x128xf32>,
    %c0_3 = arith.constant 0 : index
    %c0_4 = arith.constant 0 : index
    %2 = vector.load %arg2[%c0_3, %c0_4] : memref<128x128xbf16, #tpu.memory_space<vmem>>, vector<128x128xbf16>
    %c0_5 = arith.constant 0 : index
    %c0_6 = arith.constant 0 : index
    %3 = vector.load %arg6[%c0_5, %c0_6] : memref<1x128xf32, #tpu.memory_space<vmem>>, vector<1x128xf32>
    %4 = arith.truncf %0 : vector<8x128xf32> to vector<8x128xbf16>
    %cst = arith.constant dense<0.000000e+00> : vector<8x128xf32>
    %5 = tpu.matmul %4, %2, %cst {dimension_numbers = #tpu.dot_dimension_numbers<[1], [0], [0], [1], [0, 0, 1, 1], [], []>} : vector<8x128xbf16>, vector<128x128xbf16>, vector<8x128xf32> -> vector<8x128xf32>
    %6 = vector.broadcast %3 : vector<1x128xf32> to vector<8x128xf32>
    %7 = arith.addf %5, %6 : vector<8x128xf32>
    %cst_7 = arith.constant 0.000000e+00 : f32
    %8 = vector.broadcast %cst_7 : f32 to vector<8x128xf32>
    %9 = arith.maximumf %7, %8 : vector<8x128xf32>
    %c0_8 = arith.constant 0 : index
    %c0_9 = arith.constant 0 : index
    %10 = vector.load %arg3[%c0_8, %c0_9] : memref<128x128xbf16, #tpu.memory_space<vmem>>, vector<128x128xbf16>
    %c0_10 = arith.constant 0 : index
    %c0_11 = arith.constant 0 : index
    %11 = vector.load %arg7[%c0_10, %c0_11] : memref<1x128xf32, #tpu.memory_space<vmem>>, vector<1x128xf32>
    %12 = arith.truncf %9 : vector<8x128xf32> to vector<8x128xbf16>
    %cst_12 = arith.constant dense<0.000000e+00> : vector<8x128xf32>
    %13 = tpu.matmul %12, %10, %cst_12 {dimension_numbers = #tpu.dot_dimension_numbers<[1], [0], [0], [1], [0, 0, 1, 1], [], []>} : vector<8x128xbf16>, vector<128x128xbf16>, vector<8x128xf32> -> vector<8x128xf32>
    %14 = vector.broadcast %11 : vector<1x128xf32> to vector<8x128xf32>
    %15 = arith.addf %13, %14 : vector<8x128xf32>
    %cst_13 = arith.constant 0.000000e+00 : f32
    %16 = vector.broadcast %cst_13 : f32 to vector<8x128xf32>
    %17 = arith.maximumf %15, %16 : vector<8x128xf32>
    %c0_14 = arith.constant 0 : index
    %c0_15 = arith.constant 0 : index
    %18 = vector.load %arg11[%c0_14, %c0_15] : memref<8x128xf32, #tpu.memory_space<vmem>>, vector<8x128xf32>
    %19 = arith.addf %17, %18 : vector<8x128xf32>
    %c0_16 = arith.constant 0 : index
    %c0_17 = arith.constant 0 : index
    %20 = vector.load %arg11[%c0_16, %c0_17] : memref<8x128xf32, #tpu.memory_space<vmem>>, vector<8x128xf32>
    tpu.vector_store %arg11[%c0_16, %c0_17], %19 {strides = array<i32>} : memref<8x128xf32, #tpu.memory_space<vmem>>, vector<8x128xf32>,
    %c0_18 = arith.constant 0 : index
    %c0_19 = arith.constant 0 : index
    %21 = vector.load %arg4[%c0_18, %c0_19] : memref<128x128xbf16, #tpu.memory_space<vmem>>, vector<128x128xbf16>
    %c0_20 = arith.constant 0 : index
    %c0_21 = arith.constant 0 : index
    %22 = vector.load %arg8[%c0_20, %c0_21] : memref<1x128xf32, #tpu.memory_space<vmem>>, vector<1x128xf32>
    %23 = arith.truncf %19 : vector<8x128xf32> to vector<8x128xbf16>
    %cst_22 = arith.constant dense<0.000000e+00> : vector<8x128xf32>
    %24 = tpu.matmul %23, %21, %cst_22 {dimension_numbers = #tpu.dot_dimension_numbers<[1], [0], [0], [1], [0, 0, 1, 1], [], []>} : vector<8x128xbf16>, vector<128x128xbf16>, vector<8x128xf32> -> vector<8x128xf32>
    %25 = vector.broadcast %22 : vector<1x128xf32> to vector<8x128xf32>
    %26 = arith.addf %24, %25 : vector<8x128xf32>
    %cst_23 = arith.constant 0.000000e+00 : f32
    %27 = vector.broadcast %cst_23 : f32 to vector<8x128xf32>
    %28 = arith.maximumf %26, %27 : vector<8x128xf32>
    %c0_24 = arith.constant 0 : index
    %c0_25 = arith.constant 0 : index
    %29 = vector.load %arg11[%c0_24, %c0_25] : memref<8x128xf32, #tpu.memory_space<vmem>>, vector<8x128xf32>
    %30 = arith.addf %28, %29 : vector<8x128xf32>
    %c0_26 = arith.constant 0 : index
    %c0_27 = arith.constant 0 : index
    %31 = vector.load %arg5[%c0_26, %c0_27] : memref<128x16xbf16, #tpu.memory_space<vmem>>, vector<128x16xbf16>
    %c0_28 = arith.constant 0 : index
    %c0_29 = arith.constant 0 : index
    %32 = vector.load %arg9[%c0_28, %c0_29] : memref<1x16xf32, #tpu.memory_space<vmem>>, vector<1x16xf32>
    %33 = arith.truncf %30 : vector<8x128xf32> to vector<8x128xbf16>
    %cst_30 = arith.constant dense<0.000000e+00> : vector<8x16xf32>
    %34 = tpu.matmul %33, %31, %cst_30 {dimension_numbers = #tpu.dot_dimension_numbers<[1], [0], [0], [1], [0, 0, 1, 1], [], []>} : vector<8x128xbf16>, vector<128x16xbf16>, vector<8x16xf32> -> vector<8x16xf32>
    %35 = vector.broadcast %32 : vector<1x16xf32> to vector<8x16xf32>
    %36 = arith.addf %34, %35 : vector<8x16xf32>
    %cst_31 = arith.constant 0.000000e+00 : f32
    %37 = vector.broadcast %cst_31 : f32 to vector<8x16xf32>
    %38 = arith.maximumf %36, %37 : vector<8x16xf32>
    %cst_32 = arith.constant 5.000000e-01 : f32
    %39 = vector.broadcast %cst_32 : f32 to vector<8x16xf32>
    %40 = arith.mulf %38, %39 : vector<8x16xf32>
    %c0_33 = arith.constant 0 : index
    %c0_34 = arith.constant 0 : index
    %41 = vector.load %arg10[%c0_33, %c0_34] : memref<8x16xf32, #tpu.memory_space<vmem>>, vector<8x16xf32>
    tpu.vector_store %arg10[%c0_33, %c0_34], %40 {strides = array<i32>} : memref<8x16xf32, #tpu.memory_space<vmem>>, vector<8x16xf32>,
    return
  }
  func.func @transform_0(%arg0: i32) -> (i32, i32) {
    %c0_i32 = arith.constant 0 : i32
    %c0_i32_0 = arith.constant 0 : i32
    return %arg0, %c0_i32 : i32, i32
  }
  func.func @transform_1(%arg0: i32) -> (i32, i32) {
    %c0_i32 = arith.constant 0 : i32
    %c0_i32_0 = arith.constant 0 : i32
    %c0_i32_1 = arith.constant 0 : i32
    return %c0_i32, %c0_i32_0 : i32, i32
  }
  func.func @transform_2(%arg0: i32) -> (i32, i32) {
    %c0_i32 = arith.constant 0 : i32
    %c0_i32_0 = arith.constant 0 : i32
    %c0_i32_1 = arith.constant 0 : i32
    return %c0_i32, %c0_i32_0 : i32, i32
  }
  func.func @transform_3(%arg0: i32) -> (i32, i32) {
    %c0_i32 = arith.constant 0 : i32
    %c0_i32_0 = arith.constant 0 : i32
    %c0_i32_1 = arith.constant 0 : i32
    return %c0_i32, %c0_i32_0 : i32, i32
  }
  func.func @transform_4(%arg0: i32) -> (i32, i32) {
    %c0_i32 = arith.constant 0 : i32
    %c0_i32_0 = arith.constant 0 : i32
    %c0_i32_1 = arith.constant 0 : i32
    return %c0_i32, %c0_i32_0 : i32, i32
  }
  func.func @transform_5(%arg0: i32) -> (i32, i32) {
    %c0_i32 = arith.constant 0 : i32
    %c0_i32_0 = arith.constant 0 : i32
    %c0_i32_1 = arith.constant 0 : i32
    return %c0_i32, %c0_i32_0 : i32, i32
  }
  func.func @transform_6(%arg0: i32) -> (i32, i32) {
    %c0_i32 = arith.constant 0 : i32
    %c0_i32_0 = arith.constant 0 : i32
    %c0_i32_1 = arith.constant 0 : i32
    return %c0_i32, %c0_i32_0 : i32, i32
  }
  func.func @transform_7(%arg0: i32) -> (i32, i32) {
    %c0_i32 = arith.constant 0 : i32
    %c0_i32_0 = arith.constant 0 : i32
    %c0_i32_1 = arith.constant 0 : i32
    return %c0_i32, %c0_i32_0 : i32, i32
  }
  func.func @transform_8(%arg0: i32) -> (i32, i32) {
    %c0_i32 = arith.constant 0 : i32
    %c0_i32_0 = arith.constant 0 : i32
    %c0_i32_1 = arith.constant 0 : i32
    return %c0_i32, %c0_i32_0 : i32, i32
  }
  func.func @transform_9(%arg0: i32) -> (i32, i32) {
    %c0_i32 = arith.constant 0 : i32
    %c0_i32_0 = arith.constant 0 : i32
    return %arg0, %c0_i32 : i32, i32
  }
}

</mosaic_0001>

<llo_original>
// kernel: tpu_custom_call.1
$region0: #{tpu_custom_call.1}
  #allocation0 [shape = 'u32[]', space=smem, size = 0x4, offset = 0x4, fixed_abs, tag = 'smem constant byte address 0x4 - core index']
  #allocation1 [shape = 'u32[72,128]{1,0:T(1,128)}', space=vmem, size = 0x9000, scoped, tag = 'internal scratch']
  #allocation2 [shape = 'f32[8,128]{1,0:T(8,128)}', space=vmem, size = 0x1000, scoped, tag = 'scratch operand']
  %s0 = inlined_call_operand.hbm [shape: f32[16,128], index: 0, kind: input, shape index: {}]
  %s1 = inlined_call_operand.vmem [shape: bf16[128,128], index: 1, kind: input, shape index: {}]
  %s2 = inlined_call_operand.hbm [shape: bf16[128,128], index: 2, kind: input, shape index: {}]
  %s3 = inlined_call_operand.hbm [shape: bf16[128,128], index: 3, kind: input, shape index: {}]
  %s4 = inlined_call_operand.vmem [shape: bf16[128,16], index: 4, kind: input, shape index: {}]
  %s5 = inlined_call_operand.vmem [shape: f32[1,128], index: 5, kind: input, shape index: {}]
  %s6 = inlined_call_operand.vmem [shape: f32[1,128], index: 6, kind: input, shape index: {}]
  %s7 = inlined_call_operand.vmem [shape: f32[1,128], index: 7, kind: input, shape index: {}]
  %s8 = inlined_call_operand.vmem [shape: f32[1,16], index: 8, kind: input, shape index: {}]
  %s9 = inlined_call_operand.hbm [shape: f32[16,16], index: 9, kind: output, shape index: {}]
  %s10 = sld [smem:[#allocation0]]
  $region81: #{tpu_custom_call.1} parent=0
    _
  %s12 = ssub.s32 1, %s10
  %s13 = scalar_select 0, %s12, %s10
  $region1: #{tpu_custom_call.1} parent=0
    #allocation3 [shape = 'u8[8192]{0}', space=vmem, size = 0x2000, scoped, tag = 'input window, operand 0']
    #allocation4 [shape = 's32[2]{0}', space=sflag, size = 0x8, scoped, tag = 'scoped memory for tpu_custom_call.1']
    #allocation5 [shape = 's32[2]{0}', space=sflag, size = 0x8, scoped, tag = 'scoped memory for tpu_custom_call.1']
    #allocation6 [shape = 'u8[32768]{0}', space=vmem, size = 0x8000, scoped, tag = 'input window, operand 2, single buffered']
    #allocation7 [shape = 's32[1]{0}', space=sflag, size = 0x4, scoped, tag = 'scoped memory for tpu_custom_call.1']
    #allocation8 [shape = 'u8[32768]{0}', space=vmem, size = 0x8000, scoped, tag = 'input window, operand 3, single buffered']
    #allocation9 [shape = 'u8[8192]{0}', space=vmem, size = 0x2000, scoped, tag = 'output window, operand 0']
    %14 = vsyncpa [#allocation4], 0
    %s15 = scalar_lea.sflag [#allocation4], 1
    %16 = vsyncpa %s15, 0
    %17 = vsyncpa [#allocation7], 0
    %18 = vsyncpa [#allocation5], 0
    %s19 = scalar_lea.sflag [#allocation5], 1
    %20 = vsyncpa %s19, 0
    loop: start=0, step=1, limit=4
    $region2: #{tpu_custom_call.1} parent=1 // loop_pre_header
      _
    $region3: #{tpu_custom_call.1} parent=1 // loop_header
      %s22 = sphi 0, %s26
      %p23 = scmp.ge.s32.totalorder %s22, 4
      %s32 = sphi 0, %s34
      %s35 = sphi 0, %s32
      %s36 = sphi 0, %s35
      %s52 = sphi 0, %s36
      %s56 = sphi 0, %s56
      %s58 = sphi 0, %s56
      %s59 = sphi 0, %s58
      %s73 = sphi 0, %s59
      %s77 = sphi 0, %s77
      %s79 = sphi 0, %s77
      %s80 = sphi 0, %s79
      %s94 = sphi 0, %s80
      %s98 = sphi 0, %s98
      %s100 = sphi 0, %s98
      %s101 = sphi 0, %s100
      %s115 = sphi 0, %s101
      %s119 = sphi 0, %s119
      %s121 = sphi 0, %s119
      %s122 = sphi 0, %s121
      %s136 = sphi 0, %s122
      %s140 = sphi 0, %s140
      %s142 = sphi 0, %s140
      %s143 = sphi 0, %s142
      %s157 = sphi 0, %s143
      %s161 = sphi 0, %s161
      %s163 = sphi 0, %s161
      %s164 = sphi 0, %s163
      %s178 = sphi 0, %s164
      %s182 = sphi 0, %s182
      %s184 = sphi 0, %s182
      %s185 = sphi 0, %s184
      %s199 = sphi 0, %s185
      %s203 = sphi 0, %s203
      %s205 = sphi 0, %s203
      %s206 = sphi 0, %s205
      %s220 = sphi 0, %s206
      %s226 = sphi 0, %s228
      %s229 = sphi 0, %s226
      %s230 = sphi 0, %s229
      %s246 = sphi 0, %s230
    $region4: #{tpu_custom_call.1} parent=1 // loop_header_branch
      %25 = sbr.rel (%p23) target = $region8
    $region5: #{tpu_custom_call.1} parent=1 // loop_body
      %s27 = ssub.s32 %s22, 1
      %s28 = ssub.s32 %s22, 2
      %s29 = sadd.s32 %s22, 1
      %s30 = ssub.s32 %s22, %s29
      %p31 = scmp.eq.s32.totalorder %s30, 0
      %s33 = sadd.s32 %s32, 1
      %s34 = scalar_select %p31, %s32, %s33
      %p37 = pneg %p31
      %p38 = scmp.eq.s32.totalorder %s22, 1
      %p39 = por %p37, %p38
      %p40 = scmp.ne.s32.totalorder %s32, %s35
      %p41 = scmp.eq.s32.totalorder %s22, 0
      %p42 = por %p40, %p41
      %p43 = scmp.ne.s32.totalorder %s32, %s35
      %p44 = scmp.eq.s32.totalorder %s27, 1
      %p45 = por %p43, %p44
      %p46 = scmp.ne.s32.totalorder %s35, %s36
      %p47 = scmp.eq.s32.totalorder %s27, 0
      %p48 = por %p46, %p47
      %p49 = scmp.ne.s32.totalorder %s35, %s36
      %p50 = scmp.eq.s32.totalorder %s28, 1
      %p51 = por %p49, %p50
      %p53 = scmp.ne.s32.totalorder %s36, %s52
      %p54 = scmp.eq.s32.totalorder %s28, 0
      %p55 = por %p53, %p54
      %s57 = sadd.s32 %s56, 1
      %p60 = scmp.eq.s32.totalorder %s22, 1
      %p61 = scmp.ne.s32.totalorder %s56, %s58
      %p62 = scmp.eq.s32.totalorder %s22, 0
      %p63 = por %p61, %p62
      %p64 = scmp.ne.s32.totalorder %s56, %s58
      %p65 = scmp.eq.s32.totalorder %s27, 1
      %p66 = por %p64, %p65
      %p67 = scmp.ne.s32.totalorder %s58, %s59
      %p68 = scmp.eq.s32.totalorder %s27, 0
      %p69 = por %p67, %p68
      %p70 = scmp.ne.s32.totalorder %s58, %s59
      %p71 = scmp.eq.s32.totalorder %s28, 1
      %p72 = por %p70, %p71
      %p74 = scmp.ne.s32.totalorder %s59, %s73
      %p75 = scmp.eq.s32.totalorder %s28, 0
      %p76 = por %p74, %p75
      %s78 = sadd.s32 %s77, 1
      %p81 = scmp.eq.s32.totalorder %s22, 1
      %p82 = scmp.ne.s32.totalorder %s77, %s79
      %p83 = scmp.eq.s32.totalorder %s22, 0
      %p84 = por %p82, %p83
      %p85 = scmp.ne.s32.totalorder %s77, %s79
      %p86 = scmp.eq.s32.totalorder %s27, 1
      %p87 = por %p85, %p86
      %p88 = scmp.ne.s32.totalorder %s79, %s80
      %p89 = scmp.eq.s32.totalorder %s27, 0
      %p90 = por %p88, %p89
      %p91 = scmp.ne.s32.totalorder %s79, %s80
      %p92 = scmp.eq.s32.totalorder %s28, 1
      %p93 = por %p91, %p92
      %p95 = scmp.ne.s32.totalorder %s80, %s94
      %p96 = scmp.eq.s32.totalorder %s28, 0
      %p97 = por %p95, %p96
      %s99 = sadd.s32 %s98, 1
      %p102 = scmp.eq.s32.totalorder %s22, 1
      %p103 = scmp.ne.s32.totalorder %s98, %s100
      %p104 = scmp.eq.s32.totalorder %s22, 0
      %p105 = por %p103, %p104
      %p106 = scmp.ne.s32.totalorder %s98, %s100
      %p107 = scmp.eq.s32.totalorder %s27, 1
      %p108 = por %p106, %p107
      %p109 = scmp.ne.s32.totalorder %s100, %s101
      %p110 = scmp.eq.s32.totalorder %s27, 0
      %p111 = por %p109, %p110
      %p112 = scmp.ne.s32.totalorder %s100, %s101
      %p113 = scmp.eq.s32.totalorder %s28, 1
      %p114 = por %p112, %p113
      %p116 = scmp.ne.s32.totalorder %s101, %s115
      %p117 = scmp.eq.s32.totalorder %s28, 0
      %p118 = por %p116, %p117
      %s120 = sadd.s32 %s119, 1
      %p123 = scmp.eq.s32.totalorder %s22, 1
      %p124 = scmp.ne.s32.totalorder %s119, %s121
      %p125 = scmp.eq.s32.totalorder %s22, 0
      %p126 = por %p124, %p125
      %p127 = scmp.ne.s32.totalorder %s119, %s121
      %p128 = scmp.eq.s32.totalorder %s27, 1
      %p129 = por %p127, %p128
      %p130 = scmp.ne.s32.totalorder %s121, %s122
      %p131 = scmp.eq.s32.totalorder %s27, 0
      %p132 = por %p130, %p131
      %p133 = scmp.ne.s32.totalorder %s121, %s122
      %p134 = scmp.eq.s32.totalorder %s28, 1
      %p135 = por %p133, %p134
      %p137 = scmp.ne.s32.totalorder %s122, %s136
      %p138 = scmp.eq.s32.totalorder %s28, 0
      %p139 = por %p137, %p138
      %s141 = sadd.s32 %s140, 1
      %p144 = scmp.eq.s32.totalorder %s22, 1
      %p145 = scmp.ne.s32.totalorder %s140, %s142
      %p146 = scmp.eq.s32.totalorder %s22, 0
      %p147 = por %p145, %p146
      %p148 = scmp.ne.s32.totalorder %s140, %s142
      %p149 = scmp.eq.s32.totalorder %s27, 1
      %p150 = por %p148, %p149
      %p151 = scmp.ne.s32.totalorder %s142, %s143
      %p152 = scmp.eq.s32.totalorder %s27, 0
      %p153 = por %p151, %p152
      %p154 = scmp.ne.s32.totalorder %s142, %s143
      %p155 = scmp.eq.s32.totalorder %s28, 1
      %p156 = por %p154, %p155
      %p158 = scmp.ne.s32.totalorder %s143, %s157
      %p159 = scmp.eq.s32.totalorder %s28, 0
      %p160 = por %p158, %p159
      %s162 = sadd.s32 %s161, 1
      %p165 = scmp.eq.s32.totalorder %s22, 1
      %p166 = scmp.ne.s32.totalorder %s161, %s163
      %p167 = scmp.eq.s32.totalorder %s22, 0
      %p168 = por %p166, %p167
      %p169 = scmp.ne.s32.totalorder %s161, %s163
      %p170 = scmp.eq.s32.totalorder %s27, 1
      %p171 = por %p169, %p170
      %p172 = scmp.ne.s32.totalorder %s163, %s164
      %p173 = scmp.eq.s32.totalorder %s27, 0
      %p174 = por %p172, %p173
      %p175 = scmp.ne.s32.totalorder %s163, %s164
      %p176 = scmp.eq.s32.totalorder %s28, 1
      %p177 = por %p175, %p176
      %p179 = scmp.ne.s32.totalorder %s164, %s178
      %p180 = scmp.eq.s32.totalorder %s28, 0
      %p181 = por %p179, %p180
      %s183 = sadd.s32 %s182, 1
      %p186 = scmp.eq.s32.totalorder %s22, 1
      %p187 = scmp.ne.s32.totalorder %s182, %s184
      %p188 = scmp.eq.s32.totalorder %s22, 0
      %p189 = por %p187, %p188
      %p190 = scmp.ne.s32.totalorder %s182, %s184
      %p191 = scmp.eq.s32.totalorder %s27, 1
      %p192 = por %p190, %p191
      %p193 = scmp.ne.s32.totalorder %s184, %s185
      %p194 = scmp.eq.s32.totalorder %s27, 0
      %p195 = por %p193, %p194
      %p196 = scmp.ne.s32.totalorder %s184, %s185
      %p197 = scmp.eq.s32.totalorder %s28, 1
      %p198 = por %p196, %p197
      %p200 = scmp.ne.s32.totalorder %s185, %s199
      %p201 = scmp.eq.s32.totalorder %s28, 0
      %p202 = por %p200, %p201
      %s204 = sadd.s32 %s203, 1
      %p207 = scmp.eq.s32.totalorder %s22, 1
      %p208 = scmp.ne.s32.totalorder %s203, %s205
      %p209 = scmp.eq.s32.totalorder %s22, 0
      %p210 = por %p208, %p209
      %p211 = scmp.ne.s32.totalorder %s203, %s205
      %p212 = scmp.eq.s32.totalorder %s27, 1
      %p213 = por %p211, %p212
      %p214 = scmp.ne.s32.totalorder %s205, %s206
      %p215 = scmp.eq.s32.totalorder %s27, 0
      %p216 = por %p214, %p215
      %p217 = scmp.ne.s32.totalorder %s205, %s206
      %p218 = scmp.eq.s32.totalorder %s28, 1
      %p219 = por %p217, %p218
      %p221 = scmp.ne.s32.totalorder %s206, %s220
      %p222 = scmp.eq.s32.totalorder %s28, 0
      %p223 = por %p221, %p222
      %s224 = ssub.s32 %s22, %s29
      %p225 = scmp.eq.s32.totalorder %s224, 0
      %s227 = sadd.s32 %s226, 1
      %s228 = scalar_select %p225, %s226, %s227
      %p231 = pneg %p225
      %p232 = scmp.eq.s32.totalorder %s22, 1
      %p233 = por %p231, %p232
      %p234 = scmp.ne.s32.totalorder %s226, %s229
      %p235 = scmp.eq.s32.totalorder %s22, 0
      %p236 = por %p234, %p235
      %p237 = scmp.ne.s32.totalorder %s226, %s229
      %p238 = scmp.eq.s32.totalorder %s27, 1
      %p239 = por %p237, %p238
      %p240 = scmp.ne.s32.totalorder %s229, %s230
      %p241 = scmp.eq.s32.totalorder %s27, 0
      %p242 = por %p240, %p241
      %p243 = scmp.ne.s32.totalorder %s229, %s230
      %p244 = scmp.eq.s32.totalorder %s28, 1
      %p245 = por %p243, %p244
      %p247 = scmp.ne.s32.totalorder %s230, %s246
      %p248 = scmp.eq.s32.totalorder %s28, 0
      %p249 = por %p247, %p248
      %p250 = scmp.le.s32.totalorder 1, %s22
      %p251 = scmp.lt.s32.totalorder %s22, 3
      %p252 = pnand %p250, %p251
      %p253 = pneg %p252
      // Predicated region
      $region9: #{tpu_custom_call.1} parent=5 // pred_check
        _
      $region10: #{tpu_custom_call.1} parent=5 // pred_check_branch
        %255 = sbr.rel (%p252) target = $region12
      $region11: #{tpu_custom_call.1} parent=5 // pred_region
        %s256 = ssub.s32 %s22, 1
        // Predicated region
        $region13: #{tpu_custom_call.1} parent=11 // pred_check
          %p257 = pneg %p69
        $region14: #{tpu_custom_call.1} parent=11 // pred_check_branch
          %259 = sbr.rel (%p257) target = $region16
        $region15: #{tpu_custom_call.1} parent=11 // pred_region
          _
        $region16: #{tpu_custom_call.1} parent=11 // pred_fallthru
          _
        // Predicated region
        $region17: #{tpu_custom_call.1} parent=11 // pred_check
          %p260 = pneg %p90
        $region18: #{tpu_custom_call.1} parent=11 // pred_check_branch
          %262 = sbr.rel (%p260) target = $region20
        $region19: #{tpu_custom_call.1} parent=11 // pred_region
          %264 = vsyncadd [#allocation7], 0
          %s265 = sshll.u32 %s2, 4
          %s266 = int_to_ptr.hbm [resolvable:$true] %s265
          %s267 = sshll.u32 [#allocation6], 4
          %s268 = int_to_ptr.vmem [resolvable:$true] %s267
          %273 = dma.hbm_to_vmem [thread:$0]  %s266, 1024, %s268, [#allocation7], 64, 64, 4
        $region20: #{tpu_custom_call.1} parent=11 // pred_fallthru
          _
        // Predicated region
        $region21: #{tpu_custom_call.1} parent=11 // pred_check
          %p274 = pneg %p111
        $region22: #{tpu_custom_call.1} parent=11 // pred_check_branch
          %276 = sbr.rel (%p274) target = $region24
        $region23: #{tpu_custom_call.1} parent=11 // pred_region
          %278 = vsyncadd [#allocation7], 0
          %s279 = sshll.u32 %s3, 4
          %s280 = int_to_ptr.hbm [resolvable:$true] %s279
          %s281 = sshll.u32 [#allocation8], 4
          %s282 = int_to_ptr.vmem [resolvable:$true] %s281
          %287 = dma.hbm_to_vmem [thread:$0]  %s280, 1024, %s282, [#allocation7], 64, 64, 4
        $region24: #{tpu_custom_call.1} parent=11 // pred_fallthru
          _
        // Predicated region
        $region25: #{tpu_custom_call.1} parent=11 // pred_check
          %p288 = pneg %p132
        $region26: #{tpu_custom_call.1} parent=11 // pred_check_branch
          %290 = sbr.rel (%p288) target = $region28
        $region27: #{tpu_custom_call.1} parent=11 // pred_region
          _
        $region28: #{tpu_custom_call.1} parent=11 // pred_fallthru
          _
        // Predicated region
        $region29: #{tpu_custom_call.1} parent=11 // pred_check
          %p291 = pneg %p153
        $region30: #{tpu_custom_call.1} parent=11 // pred_check_branch
          %293 = sbr.rel (%p291) target = $region32
        $region31: #{tpu_custom_call.1} parent=11 // pred_region
          _
        $region32: #{tpu_custom_call.1} parent=11 // pred_fallthru
          _
        // Predicated region
        $region33: #{tpu_custom_call.1} parent=11 // pred_check
          %p294 = pneg %p174
        $region34: #{tpu_custom_call.1} parent=11 // pred_check_branch
          %296 = sbr.rel (%p294) target = $region36
        $region35: #{tpu_custom_call.1} parent=11 // pred_region
          _
        $region36: #{tpu_custom_call.1} parent=11 // pred_fallthru
          _
        // Predicated region
        $region37: #{tpu_custom_call.1} parent=11 // pred_check
          %p297 = pneg %p195
        $region38: #{tpu_custom_call.1} parent=11 // pred_check_branch
          %299 = sbr.rel (%p297) target = $region40
        $region39: #{tpu_custom_call.1} parent=11 // pred_region
          _
        $region40: #{tpu_custom_call.1} parent=11 // pred_fallthru
          _
        // Predicated region
        $region41: #{tpu_custom_call.1} parent=11 // pred_check
          %p300 = pneg %p216
        $region42: #{tpu_custom_call.1} parent=11 // pred_check_branch
          %302 = sbr.rel (%p300) target = $region44
        $region43: #{tpu_custom_call.1} parent=11 // pred_region
          _
        $region44: #{tpu_custom_call.1} parent=11 // pred_fallthru
          _
      $region12: #{tpu_custom_call.1} parent=5 // pred_fallthru
        _
      %p303 = scmp.lt.s32.totalorder %s22, 2
      // Predicated region
      $region45: #{tpu_custom_call.1} parent=5 // pred_check
        %p304 = pneg %p303
      $region46: #{tpu_custom_call.1} parent=5 // pred_check_branch
        %306 = sbr.rel (%p304) target = $region48
      $region47: #{tpu_custom_call.1} parent=5 // pred_region
        // Predicated region
        $region49: #{tpu_custom_call.1} parent=47 // pred_check
          %p307 = pneg %p42
        $region50: #{tpu_custom_call.1} parent=47 // pred_check_branch
          %309 = sbr.rel (%p307) target = $region52
        $region51: #{tpu_custom_call.1} parent=47 // pred_region
          %s310 = sand.u32 %s32, 1
          %s311 = scalar_lea.sflag [#allocation4], %s310
          %s312 = sand.u32 %s32, 1
          %s313 = smul.addr %s312, 8
          %s314 = scalar_lea.vmem [#allocation3], %s313
          %316 = vsyncadd %s311, 0
          %s317 = smul.addr %s22, 8
          %s318 = scalar_lea.hbm %s0, %s317
          %s320 = sshll.u32 %s318, 4
          %s321 = int_to_ptr.hbm [resolvable:$true] %s320
          %s322 = sshll.u32 %s314, 4
          %s323 = int_to_ptr.vmem [resolvable:$true] %s322
          %325 = dma.hbm_to_vmem [thread:$0]  %s321, 128, %s323, %s311
        $region52: #{tpu_custom_call.1} parent=47 // pred_fallthru
          _
      $region48: #{tpu_custom_call.1} parent=5 // pred_fallthru
        _
      %p326 = scmp.le.s32.totalorder 1, %s22
      %p327 = scmp.lt.s32.totalorder %s22, 3
      %p328 = pnand %p326, %p327
      %p329 = pneg %p328
      // Predicated region
      $region53: #{tpu_custom_call.1} parent=5 // pred_check
        _
      $region54: #{tpu_custom_call.1} parent=5 // pred_check_branch
        %331 = sbr.rel (%p328) target = $region56
      $region55: #{tpu_custom_call.1} parent=5 // pred_region
        %s332 = ssub.s32 %s22, 1
        %s333 = sand.u32 %s35, 1
        %s334 = scalar_lea.sflag [#allocation4], %s333
        %s335 = sand.u32 %s35, 1
        %s336 = smul.addr %s335, 8
        %s337 = scalar_lea.vmem [#allocation3], %s336
        // Predicated region
        $region57: #{tpu_custom_call.1} parent=55 // pred_check
          %p338 = pneg %p48
        $region58: #{tpu_custom_call.1} parent=55 // pred_check_branch
          %340 = sbr.rel (%p338) target = $region60
        $region59: #{tpu_custom_call.1} parent=55 // pred_region
          %342 = dma.done %s334, 128
        $region60: #{tpu_custom_call.1} parent=55 // pred_fallthru
          _
        // Predicated region
        $region61: #{tpu_custom_call.1} parent=55 // pred_check
          %p343 = pneg %p90
        $region62: #{tpu_custom_call.1} parent=55 // pred_check_branch
          %345 = sbr.rel (%p343) target = $region64
        $region63: #{tpu_custom_call.1} parent=55 // pred_region
          %347 = dma.done [#allocation7], 1024
        $region64: #{tpu_custom_call.1} parent=55 // pred_fallthru
          _
        // Predicated region
        $region65: #{tpu_custom_call.1} parent=55 // pred_check
          %p348 = pneg %p111
        $region66: #{tpu_custom_call.1} parent=55 // pred_check_branch
          %350 = sbr.rel (%p348) target = $region68
        $region67: #{tpu_custom_call.1} parent=55 // pred_region
          %352 = dma.done [#allocation7], 1024
        $region68: #{tpu_custom_call.1} parent=55 // pred_fallthru
          _
        %s353 = sand.u32 %s35, 1
        %s354 = scalar_lea.sflag [#allocation4], %s353
        %s355 = sand.u32 %s35, 1
        %s356 = smul.addr %s355, 8
        %s357 = scalar_lea.vmem [#allocation3], %s356
        %p358 = pneg %p48
        %p359 = pneg %p45
        %p360 = pneg %p69
        %p361 = pneg %p66
        %p362 = pneg %p90
        %p363 = pneg %p87
        %p364 = pneg %p111
        %p365 = pneg %p108
        %p366 = pneg %p132
        %p367 = pneg %p129
        %p368 = pneg %p153
        %p369 = pneg %p150
        %p370 = pneg %p174
        %p371 = pneg %p171
        %p372 = pneg %p195
        %p373 = pneg %p192
        %p374 = pneg %p216
        %p375 = pneg %p213
        %p376 = pneg %p242
        %p377 = pneg %p239
        %s378 = sand.u32 %s229, 1
        %s379 = scalar_lea.sflag [#allocation5], %s378
        %s380 = sand.u32 %s229, 1
        %s381 = smul.addr %s380, 8
        %s382 = scalar_lea.vmem [#allocation9], %s381
        %v383 = vld [vmem:[%s337] sm:$0xff]
        %384 = vst [vmem:[#allocation2] sm:$0xff] %v383
        %v385 = vld [vmem:[%s1] sm:$0xf]
        %v386 = vld [vmem:[%s1 + $0x4] sm:$0xf]
        %v387 = vld [vmem:[%s1 + $0x8] sm:$0xf]
        %v388 = vld [vmem:[%s1 + $0xc] sm:$0xf]
        %v389 = vld [vmem:[%s1 + $0x10] sm:$0xf]
        %v390 = vld [vmem:[%s1 + $0x14] sm:$0xf]
        %v391 = vld [vmem:[%s1 + $0x18] sm:$0xf]
        %v392 = vld [vmem:[%s1 + $0x1c] sm:$0xf]
        %v393 = vld [vmem:[%s1 + $0x20] sm:$0xf]
        %v394 = vld [vmem:[%s1 + $0x24] sm:$0xf]
        %v395 = vld [vmem:[%s1 + $0x28] sm:$0xf]
        %v396 = vld [vmem:[%s1 + $0x2c] sm:$0xf]
        %v397 = vld [vmem:[%s1 + $0x30] sm:$0xf]
        %v398 = vld [vmem:[%s1 + $0x34] sm:$0xf]
        %v399 = vld [vmem:[%s1 + $0x38] sm:$0xf]
        %v400 = vld [vmem:[%s1 + $0x3c] sm:$0xf]
        %v401 = vld [vmem:[%s5] sm:$0x1]
        %v402 = vpack.c.bf16 %v383, %v383
        %v404 = vperm.slane %v401, 0
        %v422 = vunpack.c.l.b16 %v385
        %v423 = vunpack.c.l.b16 %v386
        %v424 = vunpack.c.l.b16 %v387
        %v425 = vunpack.c.l.b16 %v388
        %v426 = vunpack.c.l.b16 %v389
        %v427 = vunpack.c.l.b16 %v390
        %v428 = vunpack.c.l.b16 %v391
        %v429 = vunpack.c.l.b16 %v392
        %v430 = vunpack.c.l.b16 %v393
        %v431 = vunpack.c.l.b16 %v394
        %v432 = vunpack.c.l.b16 %v395
        %v433 = vunpack.c.l.b16 %v396
        %v434 = vunpack.c.l.b16 %v397
        %v435 = vunpack.c.l.b16 %v398
        %v436 = vunpack.c.l.b16 %v399
        %v437 = vunpack.c.l.b16 %v400
        %v438 = vpack.c.b16 %v423, %v422
        %v439 = vpack.c.b16 %v425, %v424
        %v440 = vpack.c.b16 %v427, %v426
        %v441 = vpack.c.b16 %v429, %v428
        %v442 = vpack.c.b16 %v431, %v430
        %v443 = vpack.c.b16 %v433, %v432
        %v444 = vpack.c.b16 %v435, %v434
        %v445 = vpack.c.b16 %v437, %v436
        %454 = vmatpush.bf16.msra.mxu0 %v445
        %455 = vmatpush.bf16.msra.mxu0 %v444
        %456 = vmatpush.bf16.msra.mxu0 %v443
        %457 = vmatpush.bf16.msra.mxu0 %v442
        %458 = vmatpush.bf16.msra.mxu0 %v441
        %459 = vmatpush.bf16.msra.mxu0 %v440
        %460 = vmatpush.bf16.msra.mxu0 %v439
        %461 = vmatpush.bf16.msra.mxu0 %v438
        %462 = vmatmul.bf16.gmra.mxu0 %v402
        %v463 = vpop.f32.mrf.mxu0
        %v464 = vadd.f32 %v404, %v463
        %v465 = vpop.f32.mrf.mxu0
        %466 = vdwg.mxu0
        %v467 = vmax.f32 %v464, 0.0
        %v468 = vld [vmem:[#allocation6] sm:$0xf]
        %v469 = vld [vmem:[#allocation6 + $0x4] sm:$0xf]
        %v470 = vld [vmem:[#allocation6 + $0x8] sm:$0xf]
        %v471 = vld [vmem:[#allocation6 + $0xc] sm:$0xf]
        %v472 = vld [vmem:[#allocation6 + $0x10] sm:$0xf]
        %v473 = vld [vmem:[#allocation6 + $0x14] sm:$0xf]
        %v474 = vld [vmem:[#allocation6 + $0x18] sm:$0xf]
        %v475 = vld [vmem:[#allocation6 + $0x1c] sm:$0xf]
        %v476 = vld [vmem:[#allocation6 + $0x20] sm:$0xf]
        %v477 = vld [vmem:[#allocation6 + $0x24] sm:$0xf]
        %v478 = vld [vmem:[#allocation6 + $0x28] sm:$0xf]
        %v479 = vld [vmem:[#allocation6 + $0x2c] sm:$0xf]
        %v480 = vld [vmem:[#allocation6 + $0x30] sm:$0xf]
        %v481 = vld [vmem:[#allocation6 + $0x34] sm:$0xf]
        %v482 = vld [vmem:[#allocation6 + $0x38] sm:$0xf]
        %v483 = vld [vmem:[#allocation6 + $0x3c] sm:$0xf]
        %v484 = vld [vmem:[%s6] sm:$0x1]
        %v485 = vpack.c.bf16 %v467, %v467
        %v487 = vperm.slane %v484, 0
        %v505 = vunpack.c.l.b16 %v468
        %v506 = vunpack.c.l.b16 %v469
        %v507 = vunpack.c.l.b16 %v470
        %v508 = vunpack.c.l.b16 %v471
        %v509 = vunpack.c.l.b16 %v472
        %v510 = vunpack.c.l.b16 %v473
        %v511 = vunpack.c.l.b16 %v474
        %v512 = vunpack.c.l.b16 %v475
        %v513 = vunpack.c.l.b16 %v476
        %v514 = vunpack.c.l.b16 %v477
        %v515 = vunpack.c.l.b16 %v478
        %v516 = vunpack.c.l.b16 %v479
        %v517 = vunpack.c.l.b16 %v480
        %v518 = vunpack.c.l.b16 %v481
        %v519 = vunpack.c.l.b16 %v482
        %v520 = vunpack.c.l.b16 %v483
        %v521 = vpack.c.b16 %v506, %v505
        %v522 = vpack.c.b16 %v508, %v507
        %v523 = vpack.c.b16 %v510, %v509
        %v524 = vpack.c.b16 %v512, %v511
        %v525 = vpack.c.b16 %v514, %v513
        %v526 = vpack.c.b16 %v516, %v515
        %v527 = vpack.c.b16 %v518, %v517
        %v528 = vpack.c.b16 %v520, %v519
        %537 = vmatpush.bf16.msra.mxu0 %v528
        %538 = vmatpush.bf16.msra.mxu0 %v527
        %539 = vmatpush.bf16.msra.mxu0 %v526
        %540 = vmatpush.bf16.msra.mxu0 %v525
        %541 = vmatpush.bf16.msra.mxu0 %v524
        %542 = vmatpush.bf16.msra.mxu0 %v523
        %543 = vmatpush.bf16.msra.mxu0 %v522
        %544 = vmatpush.bf16.msra.mxu0 %v521
        %545 = vmatmul.bf16.gmra.mxu0 %v485
        %v546 = vpop.f32.mrf.mxu0
        %v547 = vadd.f32 %v487, %v546
        %v548 = vpop.f32.mrf.mxu0
        %549 = vdwg.mxu0
        %v550 = vmax.f32 %v547, 0.0
        %v551 = vld [vmem:[#allocation2] sm:$0xff]
        %v552 = vadd.f32 %v550, %v551
        %553 = vst [vmem:[#allocation2] sm:$0xff] %v552
        %v554 = vld [vmem:[#allocation8] sm:$0xf]
        %v555 = vld [vmem:[#allocation8 + $0x4] sm:$0xf]
        %v556 = vld [vmem:[#allocation8 + $0x8] sm:$0xf]
        %v557 = vld [vmem:[#allocation8 + $0xc] sm:$0xf]
        %v558 = vld [vmem:[#allocation8 + $0x10] sm:$0xf]
        %v559 = vld [vmem:[#allocation8 + $0x14] sm:$0xf]
        %v560 = vld [vmem:[#allocation8 + $0x18] sm:$0xf]
        %v561 = vld [vmem:[#allocation8 + $0x1c] sm:$0xf]
        %v562 = vld [vmem:[#allocation8 + $0x20] sm:$0xf]
        %v563 = vld [vmem:[#allocation8 + $0x24] sm:$0xf]
        %v564 = vld [vmem:[#allocation8 + $0x28] sm:$0xf]
        %v565 = vld [vmem:[#allocation8 + $0x2c] sm:$0xf]
        %v566 = vld [vmem:[#allocation8 + $0x30] sm:$0xf]
        %v567 = vld [vmem:[#allocation8 + $0x34] sm:$0xf]
        %v568 = vld [vmem:[#allocation8 + $0x38] sm:$0xf]
        %v569 = vld [vmem:[#allocation8 + $0x3c] sm:$0xf]
        %v570 = vld [vmem:[%s7] sm:$0x1]
        %v571 = vpack.c.bf16 %v552, %v552
        %v573 = vperm.slane %v570, 0
        %v591 = vunpack.c.l.b16 %v554
        %v592 = vunpack.c.l.b16 %v555
        %v593 = vunpack.c.l.b16 %v556
        %v594 = vunpack.c.l.b16 %v557
        %v595 = vunpack.c.l.b16 %v558
        %v596 = vunpack.c.l.b16 %v559
        %v597 = vunpack.c.l.b16 %v560
        %v598 = vunpack.c.l.b16 %v561
        %v599 = vunpack.c.l.b16 %v562
        %v600 = vunpack.c.l.b16 %v563
        %v601 = vunpack.c.l.b16 %v564
        %v602 = vunpack.c.l.b16 %v565
        %v603 = vunpack.c.l.b16 %v566
        %v604 = vunpack.c.l.b16 %v567
        %v605 = vunpack.c.l.b16 %v568
        %v606 = vunpack.c.l.b16 %v569
        %v607 = vpack.c.b16 %v592, %v591
        %v608 = vpack.c.b16 %v594, %v593
        %v609 = vpack.c.b16 %v596, %v595
        %v610 = vpack.c.b16 %v598, %v597
        %v611 = vpack.c.b16 %v600, %v599
        %v612 = vpack.c.b16 %v602, %v601
        %v613 = vpack.c.b16 %v604, %v603
        %v614 = vpack.c.b16 %v606, %v605
        %623 = vmatpush.bf16.msra.mxu0 %v614
        %624 = vmatpush.bf16.msra.mxu0 %v613
        %625 = vmatpush.bf16.msra.mxu0 %v612
        %626 = vmatpush.bf16.msra.mxu0 %v611
        %627 = vmatpush.bf16.msra.mxu0 %v610
        %628 = vmatpush.bf16.msra.mxu0 %v609
        %629 = vmatpush.bf16.msra.mxu0 %v608
        %630 = vmatpush.bf16.msra.mxu0 %v607
        %631 = vmatmul.bf16.gmra.mxu0 %v571
        %v632 = vpop.f32.mrf.mxu0
        %v633 = vadd.f32 %v573, %v632
        %v634 = vpop.f32.mrf.mxu0
        %635 = vdwg.mxu0
        %v636 = vmax.f32 %v633, 0.0
        %v637 = vld [vmem:[#allocation2] sm:$0xff]
        %v638 = vadd.f32 %v636, %v637
        %v639 = vld [vmem:[%s4] sm:$0xf]
        %v640 = vld [vmem:[%s4 + $0x4] sm:$0xf]
        %v641 = vld [vmem:[%s4 + $0x8] sm:$0xf]
        %v642 = vld [vmem:[%s4 + $0xc] sm:$0xf]
        %v643 = vld [vmem:[%s4 + $0x10] sm:$0xf]
        %v644 = vld [vmem:[%s4 + $0x14] sm:$0xf]
        %v645 = vld [vmem:[%s4 + $0x18] sm:$0xf]
        %v646 = vld [vmem:[%s4 + $0x1c] sm:$0xf]
        %v647 = vld [vmem:[%s4 + $0x20] sm:$0xf]
        %v648 = vld [vmem:[%s4 + $0x24] sm:$0xf]
        %v649 = vld [vmem:[%s4 + $0x28] sm:$0xf]
        %v650 = vld [vmem:[%s4 + $0x2c] sm:$0xf]
        %v651 = vld [vmem:[%s4 + $0x30] sm:$0xf]
        %v652 = vld [vmem:[%s4 + $0x34] sm:$0xf]
        %v653 = vld [vmem:[%s4 + $0x38] sm:$0xf]
        %v654 = vld [vmem:[%s4 + $0x3c] sm:$0xf]
        %v655 = vld [vmem:[%s8] sm:$0x1]
        %v656 = vpack.c.bf16 %v638, %v638
        %v658 = vperm.slane %v655, 0
        %v676 = vunpack.c.l.b16 %v639
        %v677 = vunpack.c.l.b16 %v640
        %v678 = vunpack.c.l.b16 %v641
        %v679 = vunpack.c.l.b16 %v642
        %v680 = vunpack.c.l.b16 %v643
        %v681 = vunpack.c.l.b16 %v644
        %v682 = vunpack.c.l.b16 %v645
        %v683 = vunpack.c.l.b16 %v646
        %v684 = vunpack.c.l.b16 %v647
        %v685 = vunpack.c.l.b16 %v648
        %v686 = vunpack.c.l.b16 %v649
        %v687 = vunpack.c.l.b16 %v650
        %v688 = vunpack.c.l.b16 %v651
        %v689 = vunpack.c.l.b16 %v652
        %v690 = vunpack.c.l.b16 %v653
        %v691 = vunpack.c.l.b16 %v654
        %v692 = vpack.c.b16 %v677, %v676
        %v693 = vpack.c.b16 %v679, %v678
        %v694 = vpack.c.b16 %v681, %v680
        %v695 = vpack.c.b16 %v683, %v682
        %v696 = vpack.c.b16 %v685, %v684
        %v697 = vpack.c.b16 %v687, %v686
        %v698 = vpack.c.b16 %v689, %v688
        %v699 = vpack.c.b16 %v691, %v690
        %708 = vmatpush.bf16.msra.mxu0 %v699
        %709 = vmatpush.bf16.msra.mxu0 %v698
        %710 = vmatpush.bf16.msra.mxu0 %v697
        %711 = vmatpush.bf16.msra.mxu0 %v696
        %712 = vmatpush.bf16.msra.mxu0 %v695
        %713 = vmatpush.bf16.msra.mxu0 %v694
        %714 = vmatpush.bf16.msra.mxu0 %v693
        %715 = vmatpush.bf16.msra.mxu0 %v692
        %716 = vmatmul.bf16.gmra.mxu0 %v656
        %v717 = vpop.f32.mrf.mxu0
        %v718 = vadd.f32 %v658, %v717
        %v719 = vpop.f32.mrf.mxu0
        %720 = vdwg.mxu0
        %v721 = vmax.f32 %v718, 0.0
        %v722 = vmul.f32 %v721, 0.5
        %vm723 = vcmask 130048
        %724 = vst.msk [vmem:[%s382] sm:$0xff] %vm723, %v722
        %s725 = sand.u32 %s229, 1
        %s726 = scalar_lea.sflag [#allocation5], %s725
        %s727 = sand.u32 %s229, 1
        %s728 = smul.addr %s727, 8
        %s729 = scalar_lea.vmem [#allocation9], %s728
        // Predicated region
        $region69: #{tpu_custom_call.1} parent=55 // pred_check
          %p730 = pneg %p239
        $region70: #{tpu_custom_call.1} parent=55 // pred_check_branch
          %732 = sbr.rel (%p730) target = $region72
        $region71: #{tpu_custom_call.1} parent=55 // pred_region
          %734 = vsyncadd %s726, 0
          %s735 = smul.addr %s27, 8
          %s736 = scalar_lea.hbm %s9, %s735
          %s738 = sshll.u32 %s729, 4
          %s739 = int_to_ptr.vmem [resolvable:$true] %s738
          %s740 = sshll.u32 %s736, 4
          %s741 = int_to_ptr.hbm [resolvable:$true] %s740
          %743 = dma.vmem_to_hbm [thread:$0]  %s739, 128, %s741, %s726
        $region72: #{tpu_custom_call.1} parent=55 // pred_fallthru
          _
      $region56: #{tpu_custom_call.1} parent=5 // pred_fallthru
        _
      %p744 = scmp.le.s32.totalorder 2, %s22
      // Predicated region
      $region73: #{tpu_custom_call.1} parent=5 // pred_check
        %p745 = pneg %p744
      $region74: #{tpu_custom_call.1} parent=5 // pred_check_branch
        %747 = sbr.rel (%p745) target = $region76
      $region75: #{tpu_custom_call.1} parent=5 // pred_region
        %s748 = ssub.s32 %s22, 2
        // Predicated region
        $region77: #{tpu_custom_call.1} parent=75 // pred_check
          %p749 = pneg %p245
        $region78: #{tpu_custom_call.1} parent=75 // pred_check_branch
          %751 = sbr.rel (%p749) target = $region80
        $region79: #{tpu_custom_call.1} parent=75 // pred_region
          %s752 = sand.u32 %s230, 1
          %s753 = scalar_lea.sflag [#allocation5], %s752
          %s754 = sand.u32 %s230, 1
          %s755 = smul.addr %s754, 8
          %s756 = scalar_lea.vmem [#allocation9], %s755
          %758 = dma.done %s753, 128
        $region80: #{tpu_custom_call.1} parent=75 // pred_fallthru
          _
      $region76: #{tpu_custom_call.1} parent=5 // pred_fallthru
        _
    $region6: #{tpu_custom_call.1} parent=1 // loop_footer
      %s26 = sadd.s32 1, %s22
    $region7: #{tpu_custom_call.1} parent=1 // loop_footer_branch
      %21 = sbr.rel target = $region3
    $region8: #{tpu_custom_call.1} parent=1 // loop_exit
      _
    %759 = vsyncpa [#allocation4], 1
    %s760 = scalar_lea.sflag [#allocation4], 1
    %761 = vsyncpa %s760, 1
    %762 = vsyncpa [#allocation7], 1
    %763 = vsyncpa [#allocation5], 1
    %s764 = scalar_lea.sflag [#allocation5], 1
    %765 = vsyncpa %s764, 1

// kernel: tpu_custom_call.1
$region0: #{tpu_custom_call.1}
  #allocation0 [shape = 'u32[]', space=smem, size = 0x4, offset = 0x4, fixed_abs, tag = 'smem constant byte address 0x4 - core index']
  #allocation1 [shape = 'u32[72,128]{1,0:T(1,128)}', space=vmem, size = 0x9000, scoped, tag = 'internal scratch']
  #allocation2 [shape = 'f32[8,128]{1,0:T(8,128)}', space=vmem, size = 0x1000, scoped, tag = 'scratch operand']
  %s0 = inlined_call_operand.hbm [shape: f32[16,128], index: 0, kind: input, shape index: {}]
  %s1 = inlined_call_operand.vmem [shape: bf16[128,128], index: 1, kind: input, shape index: {}]
  %s2 = inlined_call_operand.hbm [shape: bf16[128,128], index: 2, kind: input, shape index: {}]
  %s3 = inlined_call_operand.hbm [shape: bf16[128,128], index: 3, kind: input, shape index: {}]
  %s4 = inlined_call_operand.vmem [shape: bf16[128,16], index: 4, kind: input, shape index: {}]
  %s5 = inlined_call_operand.vmem [shape: f32[1,128], index: 5, kind: input, shape index: {}]
  %s6 = inlined_call_operand.vmem [shape: f32[1,128], index: 6, kind: input, shape index: {}]
  %s7 = inlined_call_operand.vmem [shape: f32[1,128], index: 7, kind: input, shape index: {}]
  %s8 = inlined_call_operand.vmem [shape: f32[1,16], index: 8, kind: input, shape index: {}]
  %s9 = inlined_call_operand.hbm [shape: f32[16,16], index: 9, kind: output, shape index: {}]
  %s10 = sld [smem:[#allocation0]]
  $region81: #{tpu_custom_call.1} parent=0
    _
  %s12 = ssub.s32 1, %s10
  %s13 = scalar_select 0, %s12, %s10
  $region1: #{tpu_custom_call.1} parent=0
    #allocation3 [shape = 'u8[8192]{0}', space=vmem, size = 0x2000, scoped, tag = 'input window, operand 0']
    #allocation4 [shape = 's32[2]{0}', space=sflag, size = 0x8, scoped, tag = 'scoped memory for tpu_custom_call.1']
    #allocation5 [shape = 's32[2]{0}', space=sflag, size = 0x8, scoped, tag = 'scoped memory for tpu_custom_call.1']
    #allocation6 [shape = 'u8[32768]{0}', space=vmem, size = 0x8000, scoped, tag = 'input window, operand 2, single buffered']
    #allocation7 [shape = 's32[1]{0}', space=sflag, size = 0x4, scoped, tag = 'scoped memory for tpu_custom_call.1']
    #allocation8 [shape = 'u8[32768]{0}', space=vmem, size = 0x8000, scoped, tag = 'input window, operand 3, single buffered']
    #allocation9 [shape = 'u8[8192]{0}', space=vmem, size = 0x2000, scoped, tag = 'output window, operand 0']
    %14 = vsyncpa [#allocation4], 0
    %s15 = scalar_lea.sflag [#allocation4], 1
    %16 = vsyncpa %s15, 0
    %17 = vsyncpa [#allocation7], 0
    %18 = vsyncpa [#allocation5], 0
    %s19 = scalar_lea.sflag [#allocation5], 1
    %20 = vsyncpa %s19, 0
    loop: start=0, step=1, limit=4
    $region2: #{tpu_custom_call.1} parent=1 // loop_pre_header
      _
    $region3: #{tpu_custom_call.1} parent=1 // loop_header
      %s22 = sphi 0, %s26
      %p23 = scmp.ge.s32.totalorder %s22, 4
      %s32 = sphi 0, %s34
      %s35 = sphi 0, %s32
      %s36 = sphi 0, %s35
      %s52 = sphi 0, %s36
      %s56 = sphi 0, %s56
      %s58 = sphi 0, %s56
      %s59 = sphi 0, %s58
      %s73 = sphi 0, %s59
      %s77 = sphi 0, %s77
      %s79 = sphi 0, %s77
      %s80 = sphi 0, %s79
      %s94 = sphi 0, %s80
      %s98 = sphi 0, %s98
      %s100 = sphi 0, %s98
      %s101 = sphi 0, %s100
      %s115 = sphi 0, %s101
      %s119 = sphi 0, %s119
      %s121 = sphi 0, %s119
      %s122 = sphi 0, %s121
      %s136 = sphi 0, %s122
      %s140 = sphi 0, %s140
      %s142 = sphi 0, %s140
      %s143 = sphi 0, %s142
      %s157 = sphi 0, %s143
      %s161 = sphi 0, %s161
      %s163 = sphi 0, %s161
      %s164 = sphi 0, %s163
      %s178 = sphi 0, %s164
      %s182 = sphi 0, %s182
      %s184 = sphi 0, %s182
      %s185 = sphi 0, %s184
      %s199 = sphi 0, %s185
      %s203 = sphi 0, %s203
      %s205 = sphi 0, %s203
      %s206 = sphi 0, %s205
      %s220 = sphi 0, %s206
      %s226 = sphi 0, %s228
      %s229 = sphi 0, %s226
      %s230 = sphi 0, %s229
      %s246 = sphi 0, %s230
    $region4: #{tpu_custom_call.1} parent=1 // loop_header_branch
      %25 = sbr.rel (%p23) target = $region8
    $region5: #{tpu_custom_call.1} parent=1 // loop_body
      %s27 = ssub.s32 %s22, 1
      %s28 = ssub.s32 %s22, 2
      %s29 = sadd.s32 %s22, 1
      %s30 = ssub.s32 %s22, %s29
      %p31 = scmp.eq.s32.totalorder %s30, 0
      %s33 = sadd.s32 %s32, 1
      %s34 = scalar_select %p31, %s32, %s33
      %p37 = pneg %p31
      %p38 = scmp.eq.s32.totalorder %s22, 1
      %p39 = por %p37, %p38
      %p40 = scmp.ne.s32.totalorder %s32, %s35
      %p41 = scmp.eq.s32.totalorder %s22, 0
      %p42 = por %p40, %p41
      %p43 = scmp.ne.s32.totalorder %s32, %s35
      %p44 = scmp.eq.s32.totalorder %s27, 1
      %p45 = por %p43, %p44
      %p46 = scmp.ne.s32.totalorder %s35, %s36
      %p47 = scmp.eq.s32.totalorder %s27, 0
      %p48 = por %p46, %p47
      %p49 = scmp.ne.s32.totalorder %s35, %s36
      %p50 = scmp.eq.s32.totalorder %s28, 1
      %p51 = por %p49, %p50
      %p53 = scmp.ne.s32.totalorder %s36, %s52
      %p54 = scmp.eq.s32.totalorder %s28, 0
      %p55 = por %p53, %p54
      %s57 = sadd.s32 %s56, 1
      %p60 = scmp.eq.s32.totalorder %s22, 1
      %p61 = scmp.ne.s32.totalorder %s56, %s58
      %p62 = scmp.eq.s32.totalorder %s22, 0
      %p63 = por %p61, %p62
      %p64 = scmp.ne.s32.totalorder %s56, %s58
      %p65 = scmp.eq.s32.totalorder %s27, 1
      %p66 = por %p64, %p65
      %p67 = scmp.ne.s32.totalorder %s58, %s59
      %p68 = scmp.eq.s32.totalorder %s27, 0
      %p69 = por %p67, %p68
      %p70 = scmp.ne.s32.totalorder %s58, %s59
      %p71 = scmp.eq.s32.totalorder %s28, 1
      %p72 = por %p70, %p71
      %p74 = scmp.ne.s32.totalorder %s59, %s73
      %p75 = scmp.eq.s32.totalorder %s28, 0
      %p76 = por %p74, %p75
      %s78 = sadd.s32 %s77, 1
      %p81 = scmp.eq.s32.totalorder %s22, 1
      %p82 = scmp.ne.s32.totalorder %s77, %s79
      %p83 = scmp.eq.s32.totalorder %s22, 0
      %p84 = por %p82, %p83
      %p85 = scmp.ne.s32.totalorder %s77, %s79
      %p86 = scmp.eq.s32.totalorder %s27, 1
      %p87 = por %p85, %p86
      %p88 = scmp.ne.s32.totalorder %s79, %s80
      %p89 = scmp.eq.s32.totalorder %s27, 0
      %p90 = por %p88, %p89
      %p91 = scmp.ne.s32.totalorder %s79, %s80
      %p92 = scmp.eq.s32.totalorder %s28, 1
      %p93 = por %p91, %p92
      %p95 = scmp.ne.s32.totalorder %s80, %s94
      %p96 = scmp.eq.s32.totalorder %s28, 0
      %p97 = por %p95, %p96
      %s99 = sadd.s32 %s98, 1
      %p102 = scmp.eq.s32.totalorder %s22, 1
      %p103 = scmp.ne.s32.totalorder %s98, %s100
      %p104 = scmp.eq.s32.totalorder %s22, 0
      %p105 = por %p103, %p104
      %p106 = scmp.ne.s32.totalorder %s98, %s100
      %p107 = scmp.eq.s32.totalorder %s27, 1
      %p108 = por %p106, %p107
      %p109 = scmp.ne.s32.totalorder %s100, %s101
      %p110 = scmp.eq.s32.totalorder %s27, 0
      %p111 = por %p109, %p110
      %p112 = scmp.ne.s32.totalorder %s100, %s101
      %p113 = scmp.eq.s32.totalorder %s28, 1
      %p114 = por %p112, %p113
      %p116 = scmp.ne.s32.totalorder %s101, %s115
      %p117 = scmp.eq.s32.totalorder %s28, 0
      %p118 = por %p116, %p117
      %s120 = sadd.s32 %s119, 1
      %p123 = scmp.eq.s32.totalorder %s22, 1
      %p124 = scmp.ne.s32.totalorder %s119, %s121
      %p125 = scmp.eq.s32.totalorder %s22, 0
      %p126 = por %p124, %p125
      %p127 = scmp.ne.s32.totalorder %s119, %s121
      %p128 = scmp.eq.s32.totalorder %s27, 1
      %p129 = por %p127, %p128
      %p130 = scmp.ne.s32.totalorder %s121, %s122
      %p131 = scmp.eq.s32.totalorder %s27, 0
      %p132 = por %p130, %p131
      %p133 = scmp.ne.s32.totalorder %s121, %s122
      %p134 = scmp.eq.s32.totalorder %s28, 1
      %p135 = por %p133, %p134
      %p137 = scmp.ne.s32.totalorder %s122, %s136
      %p138 = scmp.eq.s32.totalorder %s28, 0
      %p139 = por %p137, %p138
      %s141 = sadd.s32 %s140, 1
      %p144 = scmp.eq.s32.totalorder %s22, 1
      %p145 = scmp.ne.s32.totalorder %s140, %s142
      %p146 = scmp.eq.s32.totalorder %s22, 0
      %p147 = por %p145, %p146
      %p148 = scmp.ne.s32.totalorder %s140, %s142
      %p149 = scmp.eq.s32.totalorder %s27, 1
      %p150 = por %p148, %p149
      %p151 = scmp.ne.s32.totalorder %s142, %s143
      %p152 = scmp.eq.s32.totalorder %s27, 0
      %p153 = por %p151, %p152
      %p154 = scmp.ne.s32.totalorder %s142, %s143
      %p155 = scmp.eq.s32.totalorder %s28, 1
      %p156 = por %p154, %p155
      %p158 = scmp.ne.s32.totalorder %s143, %s157
      %p159 = scmp.eq.s32.totalorder %s28, 0
      %p160 = por %p158, %p159
      %s162 = sadd.s32 %s161, 1
      %p165 = scmp.eq.s32.totalorder %s22, 1
      %p166 = scmp.ne.s32.totalorder %s161, %s163
      %p167 = scmp.eq.s32.totalorder %s22, 0
      %p168 = por %p166, %p167
      %p169 = scmp.ne.s32.totalorder %s161, %s163
      %p170 = scmp.eq.s32.totalorder %s27, 1
      %p171 = por %p169, %p170
      %p172 = scmp.ne.s32.totalorder %s163, %s164
      %p173 = scmp.eq.s32.totalorder %s27, 0
      %p174 = por %p172, %p173
      %p175 = scmp.ne.s32.totalorder %s163, %s164
      %p176 = scmp.eq.s32.totalorder %s28, 1
      %p177 = por %p175, %p176
      %p179 = scmp.ne.s32.totalorder %s164, %s178
      %p180 = scmp.eq.s32.totalorder %s28, 0
      %p181 = por %p179, %p180
      %s183 = sadd.s32 %s182, 1
      %p186 = scmp.eq.s32.totalorder %s22, 1
      %p187 = scmp.ne.s32.totalorder %s182, %s184
      %p188 = scmp.eq.s32.totalorder %s22, 0
      %p189 = por %p187, %p188
      %p190 = scmp.ne.s32.totalorder %s182, %s184
      %p191 = scmp.eq.s32.totalorder %s27, 1
      %p192 = por %p190, %p191
      %p193 = scmp.ne.s32.totalorder %s184, %s185
      %p194 = scmp.eq.s32.totalorder %s27, 0
      %p195 = por %p193, %p194
      %p196 = scmp.ne.s32.totalorder %s184, %s185
      %p197 = scmp.eq.s32.totalorder %s28, 1
      %p198 = por %p196, %p197
      %p200 = scmp.ne.s32.totalorder %s185, %s199
      %p201 = scmp.eq.s32.totalorder %s28, 0
      %p202 = por %p200, %p201
      %s204 = sadd.s32 %s203, 1
      %p207 = scmp.eq.s32.totalorder %s22, 1
      %p208 = scmp.ne.s32.totalorder %s203, %s205
      %p209 = scmp.eq.s32.totalorder %s22, 0
      %p210 = por %p208, %p209
      %p211 = scmp.ne.s32.totalorder %s203, %s205
      %p212 = scmp.eq.s32.totalorder %s27, 1
      %p213 = por %p211, %p212
      %p214 = scmp.ne.s32.totalorder %s205, %s206
      %p215 = scmp.eq.s32.totalorder %s27, 0
      %p216 = por %p214, %p215
      %p217 = scmp.ne.s32.totalorder %s205, %s206
      %p218 = scmp.eq.s32.totalorder %s28, 1
      %p219 = por %p217, %p218
      %p221 = scmp.ne.s32.totalorder %s206, %s220
      %p222 = scmp.eq.s32.totalorder %s28, 0
      %p223 = por %p221, %p222
      %s224 = ssub.s32 %s22, %s29
      %p225 = scmp.eq.s32.totalorder %s224, 0
      %s227 = sadd.s32 %s226, 1
      %s228 = scalar_select %p225, %s226, %s227
      %p231 = pneg %p225
      %p232 = scmp.eq.s32.totalorder %s22, 1
      %p233 = por %p231, %p232
      %p234 = scmp.ne.s32.totalorder %s226, %s229
      %p235 = scmp.eq.s32.totalorder %s22, 0
      %p236 = por %p234, %p235
      %p237 = scmp.ne.s32.totalorder %s226, %s229
      %p238 = scmp.eq.s32.totalorder %s27, 1
      %p239 = por %p237, %p238
      %p240 = scmp.ne.s32.totalorder %s229, %s230
      %p241 = scmp.eq.s32.totalorder %s27, 0
      %p242 = por %p240, %p241
      %p243 = scmp.ne.s32.totalorder %s229, %s230
      %p244 = scmp.eq.s32.totalorder %s28, 1
      %p245 = por %p243, %p244
      %p247 = scmp.ne.s32.totalorder %s230, %s246
      %p248 = scmp.eq.s32.totalorder %s28, 0
      %p249 = por %p247, %p248
      %p250 = scmp.le.s32.totalorder 1, %s22
      %p251 = scmp.lt.s32.totalorder %s22, 3
      %p252 = pnand %p250, %p251
      %p253 = pneg %p252
      // Predicated region
      $region9: #{tpu_custom_call.1} parent=5 // pred_check
        _
      $region10: #{tpu_custom_call.1} parent=5 // pred_check_branch
        %255 = sbr.rel (%p252) target = $region12
      $region11: #{tpu_custom_call.1} parent=5 // pred_region
        %s256 = ssub.s32 %s22, 1
        // Predicated region
        $region13: #{tpu_custom_call.1} parent=11 // pred_check
          %p257 = pneg %p69
        $region14: #{tpu_custom_call.1} parent=11 // pred_check_branch
          %259 = sbr.rel (%p257) target = $region16
        $region15: #{tpu_custom_call.1} parent=11 // pred_region
          _
        $region16: #{tpu_custom_call.1} parent=11 // pred_fallthru
          _
        // Predicated region
        $region17: #{tpu_custom_call.1} parent=11 // pred_check
          %p260 = pneg %p90
        $region18: #{tpu_custom_call.1} parent=11 // pred_check_branch
          %262 = sbr.rel (%p260) target = $region20
        $region19: #{tpu_custom_call.1} parent=11 // pred_region
          %264 = vsyncadd [#allocation7], 0
          %s265 = sshll.u32 %s2, 4
          %s266 = int_to_ptr.hbm [resolvable:$true] %s265
          %s267 = sshll.u32 [#allocation6], 4
          %s268 = int_to_ptr.vmem [resolvable:$true] %s267
          %273 = dma.hbm_to_vmem [thread:$0]  %s266, 1024, %s268, [#allocation7], 64, 64, 4
        $region20: #{tpu_custom_call.1} parent=11 // pred_fallthru
          _
        // Predicated region
        $region21: #{tpu_custom_call.1} parent=11 // pred_check
          %p274 = pneg %p111
        $region22: #{tpu_custom_call.1} parent=11 // pred_check_branch
          %276 = sbr.rel (%p274) target = $region24
        $region23: #{tpu_custom_call.1} parent=11 // pred_region
          %278 = vsyncadd [#allocation7], 0
          %s279 = sshll.u32 %s3, 4
          %s280 = int_to_ptr.hbm [resolvable:$true] %s279
          %s281 = sshll.u32 [#allocation8], 4
          %s282 = int_to_ptr.vmem [resolvable:$true] %s281
          %287 = dma.hbm_to_vmem [thread:$0]  %s280, 1024, %s282, [#allocation7], 64, 64, 4
        $region24: #{tpu_custom_call.1} parent=11 // pred_fallthru
          _
        // Predicated region
        $region25: #{tpu_custom_call.1} parent=11 // pred_check
          %p288 = pneg %p132
        $region26: #{tpu_custom_call.1} parent=11 // pred_check_branch
          %290 = sbr.rel (%p288) target = $region28
        $region27: #{tpu_custom_call.1} parent=11 // pred_region
          _
        $region28: #{tpu_custom_call.1} parent=11 // pred_fallthru
          _
        // Predicated region
        $region29: #{tpu_custom_call.1} parent=11 // pred_check
          %p291 = pneg %p153
        $region30: #{tpu_custom_call.1} parent=11 // pred_check_branch
          %293 = sbr.rel (%p291) target = $region32
        $region31: #{tpu_custom_call.1} parent=11 // pred_region
          _
        $region32: #{tpu_custom_call.1} parent=11 // pred_fallthru
          _
        // Predicated region
        $region33: #{tpu_custom_call.1} parent=11 // pred_check
          %p294 = pneg %p174
        $region34: #{tpu_custom_call.1} parent=11 // pred_check_branch
          %296 = sbr.rel (%p294) target = $region36
        $region35: #{tpu_custom_call.1} parent=11 // pred_region
          _
        $region36: #{tpu_custom_call.1} parent=11 // pred_fallthru
          _
        // Predicated region
        $region37: #{tpu_custom_call.1} parent=11 // pred_check
          %p297 = pneg %p195
        $region38: #{tpu_custom_call.1} parent=11 // pred_check_branch
          %299 = sbr.rel (%p297) target = $region40
        $region39: #{tpu_custom_call.1} parent=11 // pred_region
          _
        $region40: #{tpu_custom_call.1} parent=11 // pred_fallthru
          _
        // Predicated region
        $region41: #{tpu_custom_call.1} parent=11 // pred_check
          %p300 = pneg %p216
        $region42: #{tpu_custom_call.1} parent=11 // pred_check_branch
          %302 = sbr.rel (%p300) target = $region44
        $region43: #{tpu_custom_call.1} parent=11 // pred_region
          _
        $region44: #{tpu_custom_call.1} parent=11 // pred_fallthru
          _
      $region12: #{tpu_custom_call.1} parent=5 // pred_fallthru
        _
      %p303 = scmp.lt.s32.totalorder %s22, 2
      // Predicated region
      $region45: #{tpu_custom_call.1} parent=5 // pred_check
        %p304 = pneg %p303
      $region46: #{tpu_custom_call.1} parent=5 // pred_check_branch
        %306 = sbr.rel (%p304) target = $region48
      $region47: #{tpu_custom_call.1} parent=5 // pred_region
        // Predicated region
        $region49: #{tpu_custom_call.1} parent=47 // pred_check
          %p307 = pneg %p42
        $region50: #{tpu_custom_call.1} parent=47 // pred_check_branch
          %309 = sbr.rel (%p307) target = $region52
        $region51: #{tpu_custom_call.1} parent=47 // pred_region
          %s310 = sand.u32 %s32, 1
          %s311 = scalar_lea.sflag [#allocation4], %s310
          %s312 = sand.u32 %s32, 1
          %s313 = smul.addr %s312, 8
          %s314 = scalar_lea.vmem [#allocation3], %s313
          %316 = vsyncadd %s311, 0
          %s317 = smul.addr %s22, 8
          %s318 = scalar_lea.hbm %s0, %s317
          %s320 = sshll.u32 %s318, 4
          %s321 = int_to_ptr.hbm [resolvable:$true] %s320
          %s322 = sshll.u32 %s314, 4
          %s323 = int_to_ptr.vmem [resolvable:$true] %s322
          %325 = dma.hbm_to_vmem [thread:$0]  %s321, 128, %s323, %s311
        $region52: #{tpu_custom_call.1} parent=47 // pred_fallthru
          _
      $region48: #{tpu_custom_call.1} parent=5 // pred_fallthru
        _
      %p326 = scmp.le.s32.totalorder 1, %s22
      %p327 = scmp.lt.s32.totalorder %s22, 3
      %p328 = pnand %p326, %p327
      %p329 = pneg %p328
      // Predicated region
      $region53: #{tpu_custom_call.1} parent=5 // pred_check
        _
      $region54: #{tpu_custom_call.1} parent=5 // pred_check_branch
        %331 = sbr.rel (%p328) target = $region56
      $region55: #{tpu_custom_call.1} parent=5 // pred_region
        %s332 = ssub.s32 %s22, 1
        %s333 = sand.u32 %s35, 1
        %s334 = scalar_lea.sflag [#allocation4], %s333
        %s335 = sand.u32 %s35, 1
        %s336 = smul.addr %s335, 8
        %s337 = scalar_lea.vmem [#allocation3], %s336
        // Predicated region
        $region57: #{tpu_custom_call.1} parent=55 // pred_check
          %p338 = pneg %p48
        $region58: #{tpu_custom_call.1} parent=55 // pred_check_branch
          %340 = sbr.rel (%p338) target = $region60
        $region59: #{tpu_custom_call.1} parent=55 // pred_region
          %342 = dma.done %s334, 128
        $region60: #{tpu_custom_call.1} parent=55 // pred_fallthru
          _
        // Predicated region
        $region61: #{tpu_custom_call.1} parent=55 // pred_check
          %p343 = pneg %p90
        $region62: #{tpu_custom_call.1} parent=55 // pred_check_branch
          %345 = sbr.rel (%p343) target = $region64
        $region63: #{tpu_custom_call.1} parent=55 // pred_region
          %347 = dma.done [#allocation7], 1024
        $region64: #{tpu_custom_call.1} parent=55 // pred_fallthru
          _
        // Predicated region
        $region65: #{tpu_custom_call.1} parent=55 // pred_check
          %p348 = pneg %p111
        $region66: #{tpu_custom_call.1} parent=55 // pred_check_branch
          %350 = sbr.rel (%p348) target = $region68
        $region67: #{tpu_custom_call.1} parent=55 // pred_region
          %352 = dma.done [#allocation7], 1024
        $region68: #{tpu_custom_call.1} parent=55 // pred_fallthru
          _
        %s353 = sand.u32 %s35, 1
        %s354 = scalar_lea.sflag [#allocation4], %s353
        %s355 = sand.u32 %s35, 1
        %s356 = smul.addr %s355, 8
        %s357 = scalar_lea.vmem [#allocation3], %s356
        %p358 = pneg %p48
        %p359 = pneg %p45
        %p360 = pneg %p69
        %p361 = pneg %p66
        %p362 = pneg %p90
        %p363 = pneg %p87
        %p364 = pneg %p111
        %p365 = pneg %p108
        %p366 = pneg %p132
        %p367 = pneg %p129
        %p368 = pneg %p153
        %p369 = pneg %p150
        %p370 = pneg %p174
        %p371 = pneg %p171
        %p372 = pneg %p195
        %p373 = pneg %p192
        %p374 = pneg %p216
        %p375 = pneg %p213
        %p376 = pneg %p242
        %p377 = pneg %p239
        %s378 = sand.u32 %s229, 1
        %s379 = scalar_lea.sflag [#allocation5], %s378
        %s380 = sand.u32 %s229, 1
        %s381 = smul.addr %s380, 8
        %s382 = scalar_lea.vmem [#allocation9], %s381
        %v383 = vld [vmem:[%s337] sm:$0xff]
        %384 = vst [vmem:[#allocation2] sm:$0xff] %v383
        %v385 = vld [vmem:[%s1] sm:$0xf]
        %v386 = vld [vmem:[%s1 + $0x4] sm:$0xf]
        %v387 = vld [vmem:[%s1 + $0x8] sm:$0xf]
        %v388 = vld [vmem:[%s1 + $0xc] sm:$0xf]
        %v389 = vld [vmem:[%s1 + $0x10] sm:$0xf]
        %v390 = vld [vmem:[%s1 + $0x14] sm:$0xf]
        %v391 = vld [vmem:[%s1 + $0x18] sm:$0xf]
        %v392 = vld [vmem:[%s1 + $0x1c] sm:$0xf]
        %v393 = vld [vmem:[%s1 + $0x20] sm:$0xf]
        %v394 = vld [vmem:[%s1 + $0x24] sm:$0xf]
        %v395 = vld [vmem:[%s1 + $0x28] sm:$0xf]
        %v396 = vld [vmem:[%s1 + $0x2c] sm:$0xf]
        %v397 = vld [vmem:[%s1 + $0x30] sm:$0xf]
        %v398 = vld [vmem:[%s1 + $0x34] sm:$0xf]
        %v399 = vld [vmem:[%s1 + $0x38] sm:$0xf]
        %v400 = vld [vmem:[%s1 + $0x3c] sm:$0xf]
        %v401 = vld [vmem:[%s5] sm:$0x1]
        %v402 = vpack.c.bf16 %v383, %v383
        %v404 = vperm.slane %v401, 0
        %v422 = vunpack.c.l.b16 %v385
        %v423 = vunpack.c.l.b16 %v386
        %v424 = vunpack.c.l.b16 %v387
        %v425 = vunpack.c.l.b16 %v388
        %v426 = vunpack.c.l.b16 %v389
        %v427 = vunpack.c.l.b16 %v390
        %v428 = vunpack.c.l.b16 %v391
        %v429 = vunpack.c.l.b16 %v392
        %v430 = vunpack.c.l.b16 %v393
        %v431 = vunpack.c.l.b16 %v394
        %v432 = vunpack.c.l.b16 %v395
        %v433 = vunpack.c.l.b16 %v396
        %v434 = vunpack.c.l.b16 %v397
        %v435 = vunpack.c.l.b16 %v398
        %v436 = vunpack.c.l.b16 %v399
        %v437 = vunpack.c.l.b16 %v400
        %v438 = vpack.c.b16 %v423, %v422
        %v439 = vpack.c.b16 %v425, %v424
        %v440 = vpack.c.b16 %v427, %v426
        %v441 = vpack.c.b16 %v429, %v428
        %v442 = vpack.c.b16 %v431, %v430
        %v443 = vpack.c.b16 %v433, %v432
        %v444 = vpack.c.b16 %v435, %v434
        %v445 = vpack.c.b16 %v437, %v436
        %454 = vmatpush.bf16.msra.mxu0 %v445
        %455 = vmatpush.bf16.msra.mxu0 %v444
        %456 = vmatpush.bf16.msra.mxu0 %v443
        %457 = vmatpush.bf16.msra.mxu0 %v442
        %458 = vmatpush.bf16.msra.mxu0 %v441
        %459 = vmatpush.bf16.msra.mxu0 %v440
        %460 = vmatpush.bf16.msra.mxu0 %v439
        %461 = vmatpush.bf16.msra.mxu0 %v438
        %462 = vmatmul.bf16.gmra.mxu0 %v402
        %v463 = vpop.f32.mrf.mxu0
        %v464 = vadd.f32 %v404, %v463
        %v465 = vpop.f32.mrf.mxu0
        %466 = vdwg.mxu0
        %v467 = vmax.f32 %v464, 0.0
        %v468 = vld [vmem:[#allocation6] sm:$0xf]
        %v469 = vld [vmem:[#allocation6 + $0x4] sm:$0xf]
        %v470 = vld [vmem:[#allocation6 + $0x8] sm:$0xf]
        %v471 = vld [vmem:[#allocation6 + $0xc] sm:$0xf]
        %v472 = vld [vmem:[#allocation6 + $0x10] sm:$0xf]
        %v473 = vld [vmem:[#allocation6 + $0x14] sm:$0xf]
        %v474 = vld [vmem:[#allocation6 + $0x18] sm:$0xf]
        %v475 = vld [vmem:[#allocation6 + $0x1c] sm:$0xf]
        %v476 = vld [vmem:[#allocation6 + $0x20] sm:$0xf]
        %v477 = vld [vmem:[#allocation6 + $0x24] sm:$0xf]
        %v478 = vld [vmem:[#allocation6 + $0x28] sm:$0xf]
        %v479 = vld [vmem:[#allocation6 + $0x2c] sm:$0xf]
        %v480 = vld [vmem:[#allocation6 + $0x30] sm:$0xf]
        %v481 = vld [vmem:[#allocation6 + $0x34] sm:$0xf]
        %v482 = vld [vmem:[#allocation6 + $0x38] sm:$0xf]
        %v483 = vld [vmem:[#allocation6 + $0x3c] sm:$0xf]
        %v484 = vld [vmem:[%s6] sm:$0x1]
        %v485 = vpack.c.bf16 %v467, %v467
        %v487 = vperm.slane %v484, 0
        %v505 = vunpack.c.l.b16 %v468
        %v506 = vunpack.c.l.b16 %v469
        %v507 = vunpack.c.l.b16 %v470
        %v508 = vunpack.c.l.b16 %v471
        %v509 = vunpack.c.l.b16 %v472
        %v510 = vunpack.c.l.b16 %v473
        %v511 = vunpack.c.l.b16 %v474
        %v512 = vunpack.c.l.b16 %v475
        %v513 = vunpack.c.l.b16 %v476
        %v514 = vunpack.c.l.b16 %v477
        %v515 = vunpack.c.l.b16 %v478
        %v516 = vunpack.c.l.b16 %v479
        %v517 = vunpack.c.l.b16 %v480
        %v518 = vunpack.c.l.b16 %v481
        %v519 = vunpack.c.l.b16 %v482
        %v520 = vunpack.c.l.b16 %v483
        %v521 = vpack.c.b16 %v506, %v505
        %v522 = vpack.c.b16 %v508, %v507
        %v523 = vpack.c.b16 %v510, %v509
        %v524 = vpack.c.b16 %v512, %v511
        %v525 = vpack.c.b16 %v514, %v513
        %v526 = vpack.c.b16 %v516, %v515
        %v527 = vpack.c.b16 %v518, %v517
        %v528 = vpack.c.b16 %v520, %v519
        %537 = vmatpush.bf16.msra.mxu0 %v528
        %538 = vmatpush.bf16.msra.mxu0 %v527
        %539 = vmatpush.bf16.msra.mxu0 %v526
        %540 = vmatpush.bf16.msra.mxu0 %v525
        %541 = vmatpush.bf16.msra.mxu0 %v524
        %542 = vmatpush.bf16.msra.mxu0 %v523
        %543 = vmatpush.bf16.msra.mxu0 %v522
        %544 = vmatpush.bf16.msra.mxu0 %v521
        %545 = vmatmul.bf16.gmra.mxu0 %v485
        %v546 = vpop.f32.mrf.mxu0
        %v547 = vadd.f32 %v487, %v546
        %v548 = vpop.f32.mrf.mxu0
        %549 = vdwg.mxu0
        %v550 = vmax.f32 %v547, 0.0
        %v551 = vld [vmem:[#allocation2] sm:$0xff]
        %v552 = vadd.f32 %v550, %v551
        %553 = vst [vmem:[#allocation2] sm:$0xff] %v552
        %v554 = vld [vmem:[#allocation8] sm:$0xf]
        %v555 = vld [vmem:[#allocation8 + $0x4] sm:$0xf]
        %v556 = vld [vmem:[#allocation8 + $0x8] sm:$0xf]
        %v557 = vld [vmem:[#allocation8 + $0xc] sm:$0xf]
        %v558 = vld [vmem:[#allocation8 + $0x10] sm:$0xf]
        %v559 = vld [vmem:[#allocation8 + $0x14] sm:$0xf]
        %v560 = vld [vmem:[#allocation8 + $0x18] sm:$0xf]
        %v561 = vld [vmem:[#allocation8 + $0x1c] sm:$0xf]
        %v562 = vld [vmem:[#allocation8 + $0x20] sm:$0xf]
        %v563 = vld [vmem:[#allocation8 + $0x24] sm:$0xf]
        %v564 = vld [vmem:[#allocation8 + $0x28] sm:$0xf]
        %v565 = vld [vmem:[#allocation8 + $0x2c] sm:$0xf]
        %v566 = vld [vmem:[#allocation8 + $0x30] sm:$0xf]
        %v567 = vld [vmem:[#allocation8 + $0x34] sm:$0xf]
        %v568 = vld [vmem:[#allocation8 + $0x38] sm:$0xf]
        %v569 = vld [vmem:[#allocation8 + $0x3c] sm:$0xf]
        %v570 = vld [vmem:[%s7] sm:$0x1]
        %v571 = vpack.c.bf16 %v552, %v552
        %v573 = vperm.slane %v570, 0
        %v591 = vunpack.c.l.b16 %v554
        %v592 = vunpack.c.l.b16 %v555
        %v593 = vunpack.c.l.b16 %v556
        %v594 = vunpack.c.l.b16 %v557
        %v595 = vunpack.c.l.b16 %v558
        %v596 = vunpack.c.l.b16 %v559
        %v597 = vunpack.c.l.b16 %v560
        %v598 = vunpack.c.l.b16 %v561
        %v599 = vunpack.c.l.b16 %v562
        %v600 = vunpack.c.l.b16 %v563
        %v601 = vunpack.c.l.b16 %v564
        %v602 = vunpack.c.l.b16 %v565
        %v603 = vunpack.c.l.b16 %v566
        %v604 = vunpack.c.l.b16 %v567
        %v605 = vunpack.c.l.b16 %v568
        %v606 = vunpack.c.l.b16 %v569
        %v607 = vpack.c.b16 %v592, %v591
        %v608 = vpack.c.b16 %v594, %v593
        %v609 = vpack.c.b16 %v596, %v595
        %v610 = vpack.c.b16 %v598, %v597
        %v611 = vpack.c.b16 %v600, %v599
        %v612 = vpack.c.b16 %v602, %v601
        %v613 = vpack.c.b16 %v604, %v603
        %v614 = vpack.c.b16 %v606, %v605
        %623 = vmatpush.bf16.msra.mxu0 %v614
        %624 = vmatpush.bf16.msra.mxu0 %v613
        %625 = vmatpush.bf16.msra.mxu0 %v612
        %626 = vmatpush.bf16.msra.mxu0 %v611
        %627 = vmatpush.bf16.msra.mxu0 %v610
        %628 = vmatpush.bf16.msra.mxu0 %v609
        %629 = vmatpush.bf16.msra.mxu0 %v608
        %630 = vmatpush.bf16.msra.mxu0 %v607
        %631 = vmatmul.bf16.gmra.mxu0 %v571
        %v632 = vpop.f32.mrf.mxu0
        %v633 = vadd.f32 %v573, %v632
        %v634 = vpop.f32.mrf.mxu0
        %635 = vdwg.mxu0
        %v636 = vmax.f32 %v633, 0.0
        %v637 = vld [vmem:[#allocation2] sm:$0xff]
        %v638 = vadd.f32 %v636, %v637
        %v639 = vld [vmem:[%s4] sm:$0xf]
        %v640 = vld [vmem:[%s4 + $0x4] sm:$0xf]
        %v641 = vld [vmem:[%s4 + $0x8] sm:$0xf]
        %v642 = vld [vmem:[%s4 + $0xc] sm:$0xf]
        %v643 = vld [vmem:[%s4 + $0x10] sm:$0xf]
        %v644 = vld [vmem:[%s4 + $0x14] sm:$0xf]
        %v645 = vld [vmem:[%s4 + $0x18] sm:$0xf]
        %v646 = vld [vmem:[%s4 + $0x1c] sm:$0xf]
        %v647 = vld [vmem:[%s4 + $0x20] sm:$0xf]
        %v648 = vld [vmem:[%s4 + $0x24] sm:$0xf]
        %v649 = vld [vmem:[%s4 + $0x28] sm:$0xf]
        %v650 = vld [vmem:[%s4 + $0x2c] sm:$0xf]
        %v651 = vld [vmem:[%s4 + $0x30] sm:$0xf]
        %v652 = vld [vmem:[%s4 + $0x34] sm:$0xf]
        %v653 = vld [vmem:[%s4 + $0x38] sm:$0xf]
        %v654 = vld [vmem:[%s4 + $0x3c] sm:$0xf]
        %v655 = vld [vmem:[%s8] sm:$0x1]
        %v656 = vpack.c.bf16 %v638, %v638
        %v658 = vperm.slane %v655, 0
        %v676 = vunpack.c.l.b16 %v639
        %v677 = vunpack.c.l.b16 %v640
        %v678 = vunpack.c.l.b16 %v641
        %v679 = vunpack.c.l.b16 %v642
        %v680 = vunpack.c.l.b16 %v643
        %v681 = vunpack.c.l.b16 %v644
        %v682 = vunpack.c.l.b16 %v645
        %v683 = vunpack.c.l.b16 %v646
        %v684 = vunpack.c.l.b16 %v647
        %v685 = vunpack.c.l.b16 %v648
        %v686 = vunpack.c.l.b16 %v649
        %v687 = vunpack.c.l.b16 %v650
        %v688 = vunpack.c.l.b16 %v651
        %v689 = vunpack.c.l.b16 %v652
        %v690 = vunpack.c.l.b16 %v653
        %v691 = vunpack.c.l.b16 %v654
        %v692 = vpack.c.b16 %v677, %v676
        %v693 = vpack.c.b16 %v679, %v678
        %v694 = vpack.c.b16 %v681, %v680
        %v695 = vpack.c.b16 %v683, %v682
        %v696 = vpack.c.b16 %v685, %v684
        %v697 = vpack.c.b16 %v687, %v686
        %v698 = vpack.c.b16 %v689, %v688
        %v699 = vpack.c.b16 %v691, %v690
        %708 = vmatpush.bf16.msra.mxu0 %v699
        %709 = vmatpush.bf16.msra.mxu0 %v698
        %710 = vmatpush.bf16.msra.mxu0 %v697
        %711 = vmatpush.bf16.msra.mxu0 %v696
        %712 = vmatpush.bf16.msra.mxu0 %v695
        %713 = vmatpush.bf16.msra.mxu0 %v694
        %714 = vmatpush.bf16.msra.mxu0 %v693
        %715 = vmatpush.bf16.msra.mxu0 %v692
        %716 = vmatmul.bf16.gmra.mxu0 %v656
        %v717 = vpop.f32.mrf.mxu0
        %v718 = vadd.f32 %v658, %v717
        %v719 = vpop.f32.mrf.mxu0
        %720 = vdwg.mxu0
        %v721 = vmax.f32 %v718, 0.0
        %v722 = vmul.f32 %v721, 0.5
        %vm723 = vcmask 130048
        %724 = vst.msk [vmem:[%s382] sm:$0xff] %vm723, %v722
        %s725 = sand.u32 %s229, 1
        %s726 = scalar_lea.sflag [#allocation5], %s725
        %s727 = sand.u32 %s229, 1
        %s728 = smul.addr %s727, 8
        %s729 = scalar_lea.vmem [#allocation9], %s728
        // Predicated region
        $region69: #{tpu_custom_call.1} parent=55 // pred_check
          %p730 = pneg %p239
        $region70: #{tpu_custom_call.1} parent=55 // pred_check_branch
          %732 = sbr.rel (%p730) target = $region72
        $region71: #{tpu_custom_call.1} parent=55 // pred_region
          %734 = vsyncadd %s726, 0
          %s735 = smul.addr %s27, 8
          %s736 = scalar_lea.hbm %s9, %s735
          %s738 = sshll.u32 %s729, 4
          %s739 = int_to_ptr.vmem [resolvable:$true] %s738
          %s740 = sshll.u32 %s736, 4
          %s741 = int_to_ptr.hbm [resolvable:$true] %s740
          %743 = dma.vmem_to_hbm [thread:$0]  %s739, 128, %s741, %s726
        $region72: #{tpu_custom_call.1} parent=55 // pred_fallthru
          _
      $region56: #{tpu_custom_call.1} parent=5 // pred_fallthru
        _
      %p744 = scmp.le.s32.totalorder 2, %s22
      // Predicated region
      $region73: #{tpu_custom_call.1} parent=5 // pred_check
        %p745 = pneg %p744
      $region74: #{tpu_custom_call.1} parent=5 // pred_check_branch
        %747 = sbr.rel (%p745) target = $region76
      $region75: #{tpu_custom_call.1} parent=5 // pred_region
        %s748 = ssub.s32 %s22, 2
        // Predicated region
        $region77: #{tpu_custom_call.1} parent=75 // pred_check
          %p749 = pneg %p245
        $region78: #{tpu_custom_call.1} parent=75 // pred_check_branch
          %751 = sbr.rel (%p749) target = $region80
        $region79: #{tpu_custom_call.1} parent=75 // pred_region
          %s752 = sand.u32 %s230, 1
          %s753 = scalar_lea.sflag [#allocation5], %s752
          %s754 = sand.u32 %s230, 1
          %s755 = smul.addr %s754, 8
          %s756 = scalar_lea.vmem [#allocation9], %s755
          %758 = dma.done %s753, 128
        $region80: #{tpu_custom_call.1} parent=75 // pred_fallthru
          _
      $region76: #{tpu_custom_call.1} parent=5 // pred_fallthru
        _
    $region6: #{tpu_custom_call.1} parent=1 // loop_footer
      %s26 = sadd.s32 1, %s22
    $region7: #{tpu_custom_call.1} parent=1 // loop_footer_branch
      %21 = sbr.rel target = $region3
    $region8: #{tpu_custom_call.1} parent=1 // loop_exit
      _
    %759 = vsyncpa [#allocation4], 1
    %s760 = scalar_lea.sflag [#allocation4], 1
    %761 = vsyncpa %s760, 1
    %762 = vsyncpa [#allocation7], 1
    %763 = vsyncpa [#allocation5], 1
    %s764 = scalar_lea.sflag [#allocation5], 1
    %765 = vsyncpa %s764, 1

</llo_original>
